<compile_context>
chip_gen: v7x
topology: tpu7x:2x2x1
jax: 0.10.0
libtpu: 0.0.40
codegen_flags: <defaults>
</compile_context>

<pallas_src>
import functools

import jax
import jax.numpy as jnp
from jax.experimental import pallas as pl
from jax.experimental.pallas import tpu as pltpu


_TARGET_BLOCK_BYTES = 16 * 1024 * 1024   # per input block (Pallas double-buffers it)
_VMEM_LIMIT_BYTES = 48 * 1024 * 1024     # fits v7x's 64 MiB physical VMEM per TC
_MIN_PALLAS_BYTES = 256 * 1024           # below this, XLA's fused reduce wins


def _sublane_multiple(dtype):
    # Sublane packing: 8 rows/vreg at 32-bit, 16 at 16-bit, 32 at 8-bit.
    itemsize = jnp.dtype(dtype).itemsize
    return max(8, 32 // max(itemsize, 1))


def _round_up(x, m):
    return ((x + m - 1) // m) * m


def _min_value(dtype):
    dtype = jnp.dtype(dtype)
    if jnp.issubdtype(dtype, jnp.floating):
        return float("-inf")
    return int(jnp.iinfo(dtype).min)


def _max_rows_kernel(x_ref, o_ref):
    # x_ref: (TR, L) block; reduce the lane-resident L axis (XLU reduce,
    # hidden under the HBM DMA).  Output is tiny (N/L of input traffic), so
    # the narrow (TR, 1) store is negligible.
    o_ref[...] = jnp.max(x_ref[...], axis=-1, keepdims=True)


def _max_rows_tiled_kernel(x_ref, o_ref, *, tile_l, total_l, fill, mask_tail):
    # Long-L variant: grid axis 1 walks L-tiles ("arbitrary"); the output block
    # is resident across it, so accumulate the running max directly in o_ref.
    k = pl.program_id(1)

    @pl.when(k == 0)
    def _():
        o_ref[...] = jnp.full(o_ref.shape, fill, dtype=o_ref.dtype)

    x = x_ref[...]
    if mask_tail:
        # Last L-tile may read past the array; mask padding to the identity.
        col = k * tile_l + jax.lax.broadcasted_iota(jnp.int32, x.shape, 1)
        x = jnp.where(col < total_l, x, fill)
    o_ref[...] = jnp.maximum(o_ref[...], jnp.max(x, axis=-1, keepdims=True))


def _pick_row_tile(num_rows, row_bytes, sublane, target_block_bytes):
    tr = target_block_bytes // max(row_bytes, 1)
    tr = max((tr // sublane) * sublane, sublane)
    if tr >= num_rows:
        return num_rows                      # single full-dim block (always legal)
    steps = pl.cdiv(num_rows, tr)
    if steps > 1 and steps % 2 == 1:
        # Prefer an even number of grid steps so v7x's 2 TensorCores split the
        # "parallel" row axis evenly (avoids one TC idling on the last step).
        tr_even = _round_up(pl.cdiv(num_rows, steps + 1), sublane)
        if 0 < tr_even < num_rows and pl.cdiv(num_rows, tr_even) % 2 == 0:
            tr = tr_even
    return tr


def _pooled_tiled_l(x2, num_rows, seq_len, sublane, itemsize,
                    target_block_bytes, vmem_limit_bytes):
    # Very long rows: tile the reduced axis too.
    tl = max(((target_block_bytes // max(sublane * itemsize, 1)) // 128) * 128, 128)
    tl = min(tl, _round_up(seq_len, 128))
    tr = min(sublane, num_rows)
    grid = (pl.cdiv(num_rows, tr), pl.cdiv(seq_len, tl))
    fill = _min_value(x2.dtype)
    kernel = functools.partial(
        _max_rows_tiled_kernel,
        tile_l=tl, total_l=seq_len, fill=fill,
        mask_tail=(seq_len % tl != 0),
    )
    return pl.pallas_call(
        kernel,
        out_shape=jax.ShapeDtypeStruct((num_rows, 1), x2.dtype),
        grid=grid,
        in_specs=[pl.BlockSpec((tr, tl), lambda i, k: (i, k))],
        out_specs=pl.BlockSpec((tr, 1), lambda i, k: (i, 0)),
        compiler_params=pltpu.CompilerParams(
            dimension_semantics=("parallel", "arbitrary"),
            vmem_limit_bytes=vmem_limit_bytes,
        ),
    )(x2)


def max_pooling(x, hidden_size, *,
                target_block_bytes=_TARGET_BLOCK_BYTES,
                vmem_limit_bytes=_VMEM_LIMIT_BYTES,
                min_pallas_bytes=_MIN_PALLAS_BYTES):
    """Pallas equivalent of _MaxPooling.forward(x, hidden_size).

    x: (B, C, L) array (C == hidden_size in the OpenNRE usage).
    Returns (B * C // hidden_size, hidden_size).
    """
    B, C, L = x.shape
    assert (B * C) % hidden_size == 0, "B*C must be divisible by hidden_size"

    nbytes = x.size * x.dtype.itemsize
    if nbytes < min_pallas_bytes:
        # Tiny input: Pallas launch overhead dominates; use XLA's fused reduce.
        return jnp.max(x, axis=2).reshape(-1, hidden_size)

    num_rows = B * C
    # Free, contiguous merge of leading dims — no HBM copy, no transpose.
    x2 = x.reshape(num_rows, L)

    itemsize = jnp.dtype(x.dtype).itemsize
    sublane = _sublane_multiple(x.dtype)
    # Honest VMEM estimate: L is padded to the next multiple of 128 lanes.
    row_bytes = _round_up(L, 128) * itemsize

    if sublane * row_bytes > target_block_bytes:
        pooled = _pooled_tiled_l(x2, num_rows, L, sublane, itemsize,
                                 target_block_bytes, vmem_limit_bytes)
    else:
        tr = _pick_row_tile(num_rows, row_bytes, sublane, target_block_bytes)
        grid = (pl.cdiv(num_rows, tr),)
        pooled = pl.pallas_call(
            _max_rows_kernel,
            out_shape=jax.ShapeDtypeStruct((num_rows, 1), x.dtype),
            grid=grid,
            in_specs=[pl.BlockSpec((tr, L), lambda i: (i, 0))],
            out_specs=pl.BlockSpec((tr, 1), lambda i: (i, 0)),
            compiler_params=pltpu.CompilerParams(
                dimension_semantics=("parallel",),
                vmem_limit_bytes=vmem_limit_bytes,
            ),
        )(x2)

    # Matches x.view(-1, hidden_size) in the reference (row-major, like torch).
    return pooled.reshape(-1, hidden_size)


if __name__ == "__main__":
    key = jax.random.PRNGKey(0)

    # --- main Pallas path: direct (B*C, L) layout, no transpose ---
    B, hidden_size, L = 16, 256, 32
    x = jax.random.normal(key, (B, hidden_size, L), dtype=jnp.float32)
    out = jax.block_until_ready(max_pooling(x, hidden_size))
    ref = jnp.max(x, axis=2).reshape(-1, hidden_size)
    assert out.shape == (B, hidden_size), out.shape
    assert jnp.allclose(out, ref), "f32 mismatch vs reference"

    # --- bf16 through the Pallas path (max is exact; halves HBM traffic) ---
    x_bf16 = x.astype(jnp.bfloat16)
    out_bf16 = jax.block_until_ready(max_pooling(x_bf16, hidden_size))
    ref_bf16 = jnp.max(x_bf16, axis=2).reshape(-1, hidden_size)
    assert jnp.allclose(out_bf16, ref_bf16), "bf16 mismatch vs reference"

    # --- multi-step row-tiled grid (small block override exercises tiling) ---
    out_tiled = jax.block_until_ready(
        max_pooling(x, hidden_size, target_block_bytes=128 * 1024))
    assert jnp.allclose(out_tiled, ref), "row-tiled mismatch vs reference"

    # --- long-L reduction path (L grid axis + resident accumulator + tail mask) ---
    x_long = jax.random.normal(key, (8, 4, 640), dtype=jnp.float32)
    out_long = jax.block_until_ready(
        max_pooling(x_long, 4, target_block_bytes=8 * 1024, min_pallas_bytes=0))
    ref_long = jnp.max(x_long, axis=2).reshape(-1, 4)
    assert jnp.allclose(out_long, ref_long), "long-L mismatch vs reference"

    # --- tiny-input fallback path (bypasses Pallas by design) ---
    x_small = jax.random.normal(key, (2, 32, 16), dtype=jnp.float32)
    out_small = jax.block_until_ready(max_pooling(x_small, 32))
    ref_small = jnp.max(x_small, axis=2).reshape(-1, 32)
    assert jnp.allclose(out_small, ref_small), "small-input mismatch vs reference"

    print("KERNEL_OK")
</pallas_src>

<mosaic_0001>
module attributes {stable_mosaic.version = 11 : i64} {
  func.func @_max_rows_kernel(%arg0: i32, %arg1: memref<4096x32xf32, #tpu.memory_space<vmem>>, %arg2: memref<4096x1xf32, #tpu.memory_space<vmem>>) attributes {dimension_semantics = [#tpu.dimension_semantics<parallel>], iteration_bounds = array<i64: 1>, scalar_prefetch = 0 : i64, scratch_operands = 0 : i64, tpu.core_type = #tpu.core_type<tc>, window_params = [{transform_indices = @transform_0, window_bounds = array<i64: 4096, 32>}, {transform_indices = @transform_1, window_bounds = array<i64: 4096, 1>}]} {
    %c0 = arith.constant 0 : index
    %c0_0 = arith.constant 0 : index
    %0 = vector.load %arg1[%c0, %c0_0] : memref<4096x32xf32, #tpu.memory_space<vmem>>, vector<4096x32xf32>
    %cst = arith.constant dense<0xFF800000> : vector<4096xf32>
    %1 = vector.multi_reduction <maximumf>, %0, %cst [1] : vector<4096x32xf32> to vector<4096xf32>
    %2 = vector.shape_cast %1 : vector<4096xf32> to vector<4096x1xf32>
    %c0_1 = arith.constant 0 : index
    %c0_2 = arith.constant 0 : index
    %3 = vector.load %arg2[%c0_1, %c0_2] : memref<4096x1xf32, #tpu.memory_space<vmem>>, vector<4096x1xf32>
    tpu.vector_store %arg2[%c0_1, %c0_2], %2 {strides = array<i32>} : memref<4096x1xf32, #tpu.memory_space<vmem>>, vector<4096x1xf32>,
    return
  }
  func.func @transform_0(%arg0: i32) -> (i32, i32) {
    %c0_i32 = arith.constant 0 : i32
    %c0_i32_0 = arith.constant 0 : i32
    return %arg0, %c0_i32 : i32, i32
  }
  func.func @transform_1(%arg0: i32) -> (i32, i32) {
    %c0_i32 = arith.constant 0 : i32
    %c0_i32_0 = arith.constant 0 : i32
    return %arg0, %c0_i32 : i32, i32
  }
}

</mosaic_0001>

<llo_original>
// kernel: tpu_custom_call.1
$region0: #{tpu_custom_call.1}
  #allocation0 [shape = 'u32[]', space=smem, size = 0x4, offset = 0x4, fixed_abs, tag = 'smem constant byte address 0x4 - core index']
  #allocation1 [shape = 'u32[144,128]{1,0:T(1,128)}', space=vmem, size = 0x12000, scoped, tag = 'internal scratch']
  %s0 = inlined_call_operand.vmem [shape: f32[4096,32], index: 0, kind: input, shape index: {}]
  %s1 = inlined_call_operand.vmem [shape: f32[4096,1], index: 1, kind: output, shape index: {}]
  %s2 = sld [smem:[#allocation0]]
  $region14: #{tpu_custom_call.1} parent=0
    _
  %s4 = ssub.s32 1, %s2
  %s5 = scalar_select 0, %s4, %s2
  // Predicated region
  $region2: #{tpu_custom_call.1} parent=0 // pred_check
    _
  $region3: #{tpu_custom_call.1} parent=0 // pred_check_branch
    %7 = sbr.rel (0) target = $region5
  $region4: #{tpu_custom_call.1} parent=0 // pred_region
    _
  $region5: #{tpu_custom_call.1} parent=0 // pred_fallthru
    _
  %v8 = vld [vmem:[%s0] sm:$0xff]
  %v9 = vld [vmem:[%s0 + $0x8] sm:$0xff]
  %v10 = vld [vmem:[%s0 + $0x10] sm:$0xff]
  %v11 = vld [vmem:[%s0 + $0x18] sm:$0xff]
  %v12 = vld [vmem:[%s0 + $0x20] sm:$0xff]
  %v13 = vld [vmem:[%s0 + $0x28] sm:$0xff]
  %v14 = vld [vmem:[%s0 + $0x30] sm:$0xff]
  %v15 = vld [vmem:[%s0 + $0x38] sm:$0xff]
  %v16 = vld [vmem:[%s0 + $0x40] sm:$0xff]
  %v17 = vld [vmem:[%s0 + $0x48] sm:$0xff]
  %v18 = vld [vmem:[%s0 + $0x50] sm:$0xff]
  %v19 = vld [vmem:[%s0 + $0x58] sm:$0xff]
  %v20 = vld [vmem:[%s0 + $0x60] sm:$0xff]
  %v21 = vld [vmem:[%s0 + $0x68] sm:$0xff]
  %v22 = vld [vmem:[%s0 + $0x70] sm:$0xff]
  %v23 = vld [vmem:[%s0 + $0x78] sm:$0xff]
  %v24 = vld [vmem:[%s0 + $0x80] sm:$0xff]
  %v25 = vld [vmem:[%s0 + $0x88] sm:$0xff]
  %v26 = vld [vmem:[%s0 + $0x90] sm:$0xff]
  %v27 = vld [vmem:[%s0 + $0x98] sm:$0xff]
  %v28 = vld [vmem:[%s0 + $0xa0] sm:$0xff]
  %v29 = vld [vmem:[%s0 + $0xa8] sm:$0xff]
  %v30 = vld [vmem:[%s0 + $0xb0] sm:$0xff]
  %v31 = vld [vmem:[%s0 + $0xb8] sm:$0xff]
  %v32 = vld [vmem:[%s0 + $0xc0] sm:$0xff]
  %v33 = vld [vmem:[%s0 + $0xc8] sm:$0xff]
  %v34 = vld [vmem:[%s0 + $0xd0] sm:$0xff]
  %v35 = vld [vmem:[%s0 + $0xd8] sm:$0xff]
  %v36 = vld [vmem:[%s0 + $0xe0] sm:$0xff]
  %v37 = vld [vmem:[%s0 + $0xe8] sm:$0xff]
  %v38 = vld [vmem:[%s0 + $0xf0] sm:$0xff]
  %v39 = vld [vmem:[%s0 + $0xf8] sm:$0xff]
  %v40 = vld [vmem:[%s0 + $0x100] sm:$0xff]
  %v41 = vld [vmem:[%s0 + $0x108] sm:$0xff]
  %v42 = vld [vmem:[%s0 + $0x110] sm:$0xff]
  %v43 = vld [vmem:[%s0 + $0x118] sm:$0xff]
  %v44 = vld [vmem:[%s0 + $0x120] sm:$0xff]
  %v45 = vld [vmem:[%s0 + $0x128] sm:$0xff]
  %v46 = vld [vmem:[%s0 + $0x130] sm:$0xff]
  %v47 = vld [vmem:[%s0 + $0x138] sm:$0xff]
  %v48 = vld [vmem:[%s0 + $0x140] sm:$0xff]
  %v49 = vld [vmem:[%s0 + $0x148] sm:$0xff]
  %v50 = vld [vmem:[%s0 + $0x150] sm:$0xff]
  %v51 = vld [vmem:[%s0 + $0x158] sm:$0xff]
  %v52 = vld [vmem:[%s0 + $0x160] sm:$0xff]
  %v53 = vld [vmem:[%s0 + $0x168] sm:$0xff]
  %v54 = vld [vmem:[%s0 + $0x170] sm:$0xff]
  %v55 = vld [vmem:[%s0 + $0x178] sm:$0xff]
  %v56 = vld [vmem:[%s0 + $0x180] sm:$0xff]
  %v57 = vld [vmem:[%s0 + $0x188] sm:$0xff]
  %v58 = vld [vmem:[%s0 + $0x190] sm:$0xff]
  %v59 = vld [vmem:[%s0 + $0x198] sm:$0xff]
  %v60 = vld [vmem:[%s0 + $0x1a0] sm:$0xff]
  %v61 = vld [vmem:[%s0 + $0x1a8] sm:$0xff]
  %v62 = vld [vmem:[%s0 + $0x1b0] sm:$0xff]
  %v63 = vld [vmem:[%s0 + $0x1b8] sm:$0xff]
  %v64 = vld [vmem:[%s0 + $0x1c0] sm:$0xff]
  %v65 = vld [vmem:[%s0 + $0x1c8] sm:$0xff]
  %v66 = vld [vmem:[%s0 + $0x1d0] sm:$0xff]
  %v67 = vld [vmem:[%s0 + $0x1d8] sm:$0xff]
  %v68 = vld [vmem:[%s0 + $0x1e0] sm:$0xff]
  %v69 = vld [vmem:[%s0 + $0x1e8] sm:$0xff]
  %v70 = vld [vmem:[%s0 + $0x1f0] sm:$0xff]
  %v71 = vld [vmem:[%s0 + $0x1f8] sm:$0xff]
  %v72 = vld [vmem:[%s0 + $0x200] sm:$0xff]
  %v73 = vld [vmem:[%s0 + $0x208] sm:$0xff]
  %v74 = vld [vmem:[%s0 + $0x210] sm:$0xff]
  %v75 = vld [vmem:[%s0 + $0x218] sm:$0xff]
  %v76 = vld [vmem:[%s0 + $0x220] sm:$0xff]
  %v77 = vld [vmem:[%s0 + $0x228] sm:$0xff]
  %v78 = vld [vmem:[%s0 + $0x230] sm:$0xff]
  %v79 = vld [vmem:[%s0 + $0x238] sm:$0xff]
  %v80 = vld [vmem:[%s0 + $0x240] sm:$0xff]
  %v81 = vld [vmem:[%s0 + $0x248] sm:$0xff]
  %v82 = vld [vmem:[%s0 + $0x250] sm:$0xff]
  %v83 = vld [vmem:[%s0 + $0x258] sm:$0xff]
  %v84 = vld [vmem:[%s0 + $0x260] sm:$0xff]
  %v85 = vld [vmem:[%s0 + $0x268] sm:$0xff]
  %v86 = vld [vmem:[%s0 + $0x270] sm:$0xff]
  %v87 = vld [vmem:[%s0 + $0x278] sm:$0xff]
  %v88 = vld [vmem:[%s0 + $0x280] sm:$0xff]
  %v89 = vld [vmem:[%s0 + $0x288] sm:$0xff]
  %v90 = vld [vmem:[%s0 + $0x290] sm:$0xff]
  %v91 = vld [vmem:[%s0 + $0x298] sm:$0xff]
  %v92 = vld [vmem:[%s0 + $0x2a0] sm:$0xff]
  %v93 = vld [vmem:[%s0 + $0x2a8] sm:$0xff]
  %v94 = vld [vmem:[%s0 + $0x2b0] sm:$0xff]
  %v95 = vld [vmem:[%s0 + $0x2b8] sm:$0xff]
  %v96 = vld [vmem:[%s0 + $0x2c0] sm:$0xff]
  %v97 = vld [vmem:[%s0 + $0x2c8] sm:$0xff]
  %v98 = vld [vmem:[%s0 + $0x2d0] sm:$0xff]
  %v99 = vld [vmem:[%s0 + $0x2d8] sm:$0xff]
  %v100 = vld [vmem:[%s0 + $0x2e0] sm:$0xff]
  %v101 = vld [vmem:[%s0 + $0x2e8] sm:$0xff]
  %v102 = vld [vmem:[%s0 + $0x2f0] sm:$0xff]
  %v103 = vld [vmem:[%s0 + $0x2f8] sm:$0xff]
  %v104 = vld [vmem:[%s0 + $0x300] sm:$0xff]
  %v105 = vld [vmem:[%s0 + $0x308] sm:$0xff]
  %v106 = vld [vmem:[%s0 + $0x310] sm:$0xff]
  %v107 = vld [vmem:[%s0 + $0x318] sm:$0xff]
  %v108 = vld [vmem:[%s0 + $0x320] sm:$0xff]
  %v109 = vld [vmem:[%s0 + $0x328] sm:$0xff]
  %v110 = vld [vmem:[%s0 + $0x330] sm:$0xff]
  %v111 = vld [vmem:[%s0 + $0x338] sm:$0xff]
  %v112 = vld [vmem:[%s0 + $0x340] sm:$0xff]
  %v113 = vld [vmem:[%s0 + $0x348] sm:$0xff]
  %v114 = vld [vmem:[%s0 + $0x350] sm:$0xff]
  %v115 = vld [vmem:[%s0 + $0x358] sm:$0xff]
  %v116 = vld [vmem:[%s0 + $0x360] sm:$0xff]
  %v117 = vld [vmem:[%s0 + $0x368] sm:$0xff]
  %v118 = vld [vmem:[%s0 + $0x370] sm:$0xff]
  %v119 = vld [vmem:[%s0 + $0x378] sm:$0xff]
  %v120 = vld [vmem:[%s0 + $0x380] sm:$0xff]
  %v121 = vld [vmem:[%s0 + $0x388] sm:$0xff]
  %v122 = vld [vmem:[%s0 + $0x390] sm:$0xff]
  %v123 = vld [vmem:[%s0 + $0x398] sm:$0xff]
  %v124 = vld [vmem:[%s0 + $0x3a0] sm:$0xff]
  %v125 = vld [vmem:[%s0 + $0x3a8] sm:$0xff]
  %v126 = vld [vmem:[%s0 + $0x3b0] sm:$0xff]
  %v127 = vld [vmem:[%s0 + $0x3b8] sm:$0xff]
  %v128 = vld [vmem:[%s0 + $0x3c0] sm:$0xff]
  %v129 = vld [vmem:[%s0 + $0x3c8] sm:$0xff]
  %v130 = vld [vmem:[%s0 + $0x3d0] sm:$0xff]
  %v131 = vld [vmem:[%s0 + $0x3d8] sm:$0xff]
  %v132 = vld [vmem:[%s0 + $0x3e0] sm:$0xff]
  %v133 = vld [vmem:[%s0 + $0x3e8] sm:$0xff]
  %v134 = vld [vmem:[%s0 + $0x3f0] sm:$0xff]
  %v135 = vld [vmem:[%s0 + $0x3f8] sm:$0xff]
  %v136 = vld [vmem:[%s0 + $0x400] sm:$0xff]
  %v137 = vld [vmem:[%s0 + $0x408] sm:$0xff]
  %v138 = vld [vmem:[%s0 + $0x410] sm:$0xff]
  %v139 = vld [vmem:[%s0 + $0x418] sm:$0xff]
  %v140 = vld [vmem:[%s0 + $0x420] sm:$0xff]
  %v141 = vld [vmem:[%s0 + $0x428] sm:$0xff]
  %v142 = vld [vmem:[%s0 + $0x430] sm:$0xff]
  %v143 = vld [vmem:[%s0 + $0x438] sm:$0xff]
  %v144 = vld [vmem:[%s0 + $0x440] sm:$0xff]
  %v145 = vld [vmem:[%s0 + $0x448] sm:$0xff]
  %v146 = vld [vmem:[%s0 + $0x450] sm:$0xff]
  %v147 = vld [vmem:[%s0 + $0x458] sm:$0xff]
  %v148 = vld [vmem:[%s0 + $0x460] sm:$0xff]
  %v149 = vld [vmem:[%s0 + $0x468] sm:$0xff]
  %v150 = vld [vmem:[%s0 + $0x470] sm:$0xff]
  %v151 = vld [vmem:[%s0 + $0x478] sm:$0xff]
  %v152 = vld [vmem:[%s0 + $0x480] sm:$0xff]
  %v153 = vld [vmem:[%s0 + $0x488] sm:$0xff]
  %v154 = vld [vmem:[%s0 + $0x490] sm:$0xff]
  %v155 = vld [vmem:[%s0 + $0x498] sm:$0xff]
  %v156 = vld [vmem:[%s0 + $0x4a0] sm:$0xff]
  %v157 = vld [vmem:[%s0 + $0x4a8] sm:$0xff]
  %v158 = vld [vmem:[%s0 + $0x4b0] sm:$0xff]
  %v159 = vld [vmem:[%s0 + $0x4b8] sm:$0xff]
  %v160 = vld [vmem:[%s0 + $0x4c0] sm:$0xff]
  %v161 = vld [vmem:[%s0 + $0x4c8] sm:$0xff]
  %v162 = vld [vmem:[%s0 + $0x4d0] sm:$0xff]
  %v163 = vld [vmem:[%s0 + $0x4d8] sm:$0xff]
  %v164 = vld [vmem:[%s0 + $0x4e0] sm:$0xff]
  %v165 = vld [vmem:[%s0 + $0x4e8] sm:$0xff]
  %v166 = vld [vmem:[%s0 + $0x4f0] sm:$0xff]
  %v167 = vld [vmem:[%s0 + $0x4f8] sm:$0xff]
  %v168 = vld [vmem:[%s0 + $0x500] sm:$0xff]
  %v169 = vld [vmem:[%s0 + $0x508] sm:$0xff]
  %v170 = vld [vmem:[%s0 + $0x510] sm:$0xff]
  %v171 = vld [vmem:[%s0 + $0x518] sm:$0xff]
  %v172 = vld [vmem:[%s0 + $0x520] sm:$0xff]
  %v173 = vld [vmem:[%s0 + $0x528] sm:$0xff]
  %v174 = vld [vmem:[%s0 + $0x530] sm:$0xff]
  %v175 = vld [vmem:[%s0 + $0x538] sm:$0xff]
  %v176 = vld [vmem:[%s0 + $0x540] sm:$0xff]
  %v177 = vld [vmem:[%s0 + $0x548] sm:$0xff]
  %v178 = vld [vmem:[%s0 + $0x550] sm:$0xff]
  %v179 = vld [vmem:[%s0 + $0x558] sm:$0xff]
  %v180 = vld [vmem:[%s0 + $0x560] sm:$0xff]
  %v181 = vld [vmem:[%s0 + $0x568] sm:$0xff]
  %v182 = vld [vmem:[%s0 + $0x570] sm:$0xff]
  %v183 = vld [vmem:[%s0 + $0x578] sm:$0xff]
  %v184 = vld [vmem:[%s0 + $0x580] sm:$0xff]
  %v185 = vld [vmem:[%s0 + $0x588] sm:$0xff]
  %v186 = vld [vmem:[%s0 + $0x590] sm:$0xff]
  %v187 = vld [vmem:[%s0 + $0x598] sm:$0xff]
  %v188 = vld [vmem:[%s0 + $0x5a0] sm:$0xff]
  %v189 = vld [vmem:[%s0 + $0x5a8] sm:$0xff]
  %v190 = vld [vmem:[%s0 + $0x5b0] sm:$0xff]
  %v191 = vld [vmem:[%s0 + $0x5b8] sm:$0xff]
  %v192 = vld [vmem:[%s0 + $0x5c0] sm:$0xff]
  %v193 = vld [vmem:[%s0 + $0x5c8] sm:$0xff]
  %v194 = vld [vmem:[%s0 + $0x5d0] sm:$0xff]
  %v195 = vld [vmem:[%s0 + $0x5d8] sm:$0xff]
  %v196 = vld [vmem:[%s0 + $0x5e0] sm:$0xff]
  %v197 = vld [vmem:[%s0 + $0x5e8] sm:$0xff]
  %v198 = vld [vmem:[%s0 + $0x5f0] sm:$0xff]
  %v199 = vld [vmem:[%s0 + $0x5f8] sm:$0xff]
  %v200 = vld [vmem:[%s0 + $0x600] sm:$0xff]
  %v201 = vld [vmem:[%s0 + $0x608] sm:$0xff]
  %v202 = vld [vmem:[%s0 + $0x610] sm:$0xff]
  %v203 = vld [vmem:[%s0 + $0x618] sm:$0xff]
  %v204 = vld [vmem:[%s0 + $0x620] sm:$0xff]
  %v205 = vld [vmem:[%s0 + $0x628] sm:$0xff]
  %v206 = vld [vmem:[%s0 + $0x630] sm:$0xff]
  %v207 = vld [vmem:[%s0 + $0x638] sm:$0xff]
  %v208 = vld [vmem:[%s0 + $0x640] sm:$0xff]
  %v209 = vld [vmem:[%s0 + $0x648] sm:$0xff]
  %v210 = vld [vmem:[%s0 + $0x650] sm:$0xff]
  %v211 = vld [vmem:[%s0 + $0x658] sm:$0xff]
  %v212 = vld [vmem:[%s0 + $0x660] sm:$0xff]
  %v213 = vld [vmem:[%s0 + $0x668] sm:$0xff]
  %v214 = vld [vmem:[%s0 + $0x670] sm:$0xff]
  %v215 = vld [vmem:[%s0 + $0x678] sm:$0xff]
  %v216 = vld [vmem:[%s0 + $0x680] sm:$0xff]
  %v217 = vld [vmem:[%s0 + $0x688] sm:$0xff]
  %v218 = vld [vmem:[%s0 + $0x690] sm:$0xff]
  %v219 = vld [vmem:[%s0 + $0x698] sm:$0xff]
  %v220 = vld [vmem:[%s0 + $0x6a0] sm:$0xff]
  %v221 = vld [vmem:[%s0 + $0x6a8] sm:$0xff]
  %v222 = vld [vmem:[%s0 + $0x6b0] sm:$0xff]
  %v223 = vld [vmem:[%s0 + $0x6b8] sm:$0xff]
  %v224 = vld [vmem:[%s0 + $0x6c0] sm:$0xff]
  %v225 = vld [vmem:[%s0 + $0x6c8] sm:$0xff]
  %v226 = vld [vmem:[%s0 + $0x6d0] sm:$0xff]
  %v227 = vld [vmem:[%s0 + $0x6d8] sm:$0xff]
  %v228 = vld [vmem:[%s0 + $0x6e0] sm:$0xff]
  %v229 = vld [vmem:[%s0 + $0x6e8] sm:$0xff]
  %v230 = vld [vmem:[%s0 + $0x6f0] sm:$0xff]
  %v231 = vld [vmem:[%s0 + $0x6f8] sm:$0xff]
  %v232 = vld [vmem:[%s0 + $0x700] sm:$0xff]
  %v233 = vld [vmem:[%s0 + $0x708] sm:$0xff]
  %v234 = vld [vmem:[%s0 + $0x710] sm:$0xff]
  %v235 = vld [vmem:[%s0 + $0x718] sm:$0xff]
  %v236 = vld [vmem:[%s0 + $0x720] sm:$0xff]
  %v237 = vld [vmem:[%s0 + $0x728] sm:$0xff]
  %v238 = vld [vmem:[%s0 + $0x730] sm:$0xff]
  %v239 = vld [vmem:[%s0 + $0x738] sm:$0xff]
  %v240 = vld [vmem:[%s0 + $0x740] sm:$0xff]
  %v241 = vld [vmem:[%s0 + $0x748] sm:$0xff]
  %v242 = vld [vmem:[%s0 + $0x750] sm:$0xff]
  %v243 = vld [vmem:[%s0 + $0x758] sm:$0xff]
  %v244 = vld [vmem:[%s0 + $0x760] sm:$0xff]
  %v245 = vld [vmem:[%s0 + $0x768] sm:$0xff]
  %v246 = vld [vmem:[%s0 + $0x770] sm:$0xff]
  %v247 = vld [vmem:[%s0 + $0x778] sm:$0xff]
  %v248 = vld [vmem:[%s0 + $0x780] sm:$0xff]
  %v249 = vld [vmem:[%s0 + $0x788] sm:$0xff]
  %v250 = vld [vmem:[%s0 + $0x790] sm:$0xff]
  %v251 = vld [vmem:[%s0 + $0x798] sm:$0xff]
  %v252 = vld [vmem:[%s0 + $0x7a0] sm:$0xff]
  %v253 = vld [vmem:[%s0 + $0x7a8] sm:$0xff]
  %v254 = vld [vmem:[%s0 + $0x7b0] sm:$0xff]
  %v255 = vld [vmem:[%s0 + $0x7b8] sm:$0xff]
  %v256 = vld [vmem:[%s0 + $0x7c0] sm:$0xff]
  %v257 = vld [vmem:[%s0 + $0x7c8] sm:$0xff]
  %v258 = vld [vmem:[%s0 + $0x7d0] sm:$0xff]
  %v259 = vld [vmem:[%s0 + $0x7d8] sm:$0xff]
  %v260 = vld [vmem:[%s0 + $0x7e0] sm:$0xff]
  %v261 = vld [vmem:[%s0 + $0x7e8] sm:$0xff]
  %v262 = vld [vmem:[%s0 + $0x7f0] sm:$0xff]
  %v263 = vld [vmem:[%s0 + $0x7f8] sm:$0xff]
  %v264 = vld [vmem:[%s0 + $0x800] sm:$0xff]
  %v265 = vld [vmem:[%s0 + $0x808] sm:$0xff]
  %v266 = vld [vmem:[%s0 + $0x810] sm:$0xff]
  %v267 = vld [vmem:[%s0 + $0x818] sm:$0xff]
  %v268 = vld [vmem:[%s0 + $0x820] sm:$0xff]
  %v269 = vld [vmem:[%s0 + $0x828] sm:$0xff]
  %v270 = vld [vmem:[%s0 + $0x830] sm:$0xff]
  %v271 = vld [vmem:[%s0 + $0x838] sm:$0xff]
  %v272 = vld [vmem:[%s0 + $0x840] sm:$0xff]
  %v273 = vld [vmem:[%s0 + $0x848] sm:$0xff]
  %v274 = vld [vmem:[%s0 + $0x850] sm:$0xff]
  %v275 = vld [vmem:[%s0 + $0x858] sm:$0xff]
  %v276 = vld [vmem:[%s0 + $0x860] sm:$0xff]
  %v277 = vld [vmem:[%s0 + $0x868] sm:$0xff]
  %v278 = vld [vmem:[%s0 + $0x870] sm:$0xff]
  %v279 = vld [vmem:[%s0 + $0x878] sm:$0xff]
  %v280 = vld [vmem:[%s0 + $0x880] sm:$0xff]
  %v281 = vld [vmem:[%s0 + $0x888] sm:$0xff]
  %v282 = vld [vmem:[%s0 + $0x890] sm:$0xff]
  %v283 = vld [vmem:[%s0 + $0x898] sm:$0xff]
  %v284 = vld [vmem:[%s0 + $0x8a0] sm:$0xff]
  %v285 = vld [vmem:[%s0 + $0x8a8] sm:$0xff]
  %v286 = vld [vmem:[%s0 + $0x8b0] sm:$0xff]
  %v287 = vld [vmem:[%s0 + $0x8b8] sm:$0xff]
  %v288 = vld [vmem:[%s0 + $0x8c0] sm:$0xff]
  %v289 = vld [vmem:[%s0 + $0x8c8] sm:$0xff]
  %v290 = vld [vmem:[%s0 + $0x8d0] sm:$0xff]
  %v291 = vld [vmem:[%s0 + $0x8d8] sm:$0xff]
  %v292 = vld [vmem:[%s0 + $0x8e0] sm:$0xff]
  %v293 = vld [vmem:[%s0 + $0x8e8] sm:$0xff]
  %v294 = vld [vmem:[%s0 + $0x8f0] sm:$0xff]
  %v295 = vld [vmem:[%s0 + $0x8f8] sm:$0xff]
  %v296 = vld [vmem:[%s0 + $0x900] sm:$0xff]
  %v297 = vld [vmem:[%s0 + $0x908] sm:$0xff]
  %v298 = vld [vmem:[%s0 + $0x910] sm:$0xff]
  %v299 = vld [vmem:[%s0 + $0x918] sm:$0xff]
  %v300 = vld [vmem:[%s0 + $0x920] sm:$0xff]
  %v301 = vld [vmem:[%s0 + $0x928] sm:$0xff]
  %v302 = vld [vmem:[%s0 + $0x930] sm:$0xff]
  %v303 = vld [vmem:[%s0 + $0x938] sm:$0xff]
  %v304 = vld [vmem:[%s0 + $0x940] sm:$0xff]
  %v305 = vld [vmem:[%s0 + $0x948] sm:$0xff]
  %v306 = vld [vmem:[%s0 + $0x950] sm:$0xff]
  %v307 = vld [vmem:[%s0 + $0x958] sm:$0xff]
  %v308 = vld [vmem:[%s0 + $0x960] sm:$0xff]
  %v309 = vld [vmem:[%s0 + $0x968] sm:$0xff]
  %v310 = vld [vmem:[%s0 + $0x970] sm:$0xff]
  %v311 = vld [vmem:[%s0 + $0x978] sm:$0xff]
  %v312 = vld [vmem:[%s0 + $0x980] sm:$0xff]
  %v313 = vld [vmem:[%s0 + $0x988] sm:$0xff]
  %v314 = vld [vmem:[%s0 + $0x990] sm:$0xff]
  %v315 = vld [vmem:[%s0 + $0x998] sm:$0xff]
  %v316 = vld [vmem:[%s0 + $0x9a0] sm:$0xff]
  %v317 = vld [vmem:[%s0 + $0x9a8] sm:$0xff]
  %v318 = vld [vmem:[%s0 + $0x9b0] sm:$0xff]
  %v319 = vld [vmem:[%s0 + $0x9b8] sm:$0xff]
  %v320 = vld [vmem:[%s0 + $0x9c0] sm:$0xff]
  %v321 = vld [vmem:[%s0 + $0x9c8] sm:$0xff]
  %v322 = vld [vmem:[%s0 + $0x9d0] sm:$0xff]
  %v323 = vld [vmem:[%s0 + $0x9d8] sm:$0xff]
  %v324 = vld [vmem:[%s0 + $0x9e0] sm:$0xff]
  %v325 = vld [vmem:[%s0 + $0x9e8] sm:$0xff]
  %v326 = vld [vmem:[%s0 + $0x9f0] sm:$0xff]
  %v327 = vld [vmem:[%s0 + $0x9f8] sm:$0xff]
  %v328 = vld [vmem:[%s0 + $0xa00] sm:$0xff]
  %v329 = vld [vmem:[%s0 + $0xa08] sm:$0xff]
  %v330 = vld [vmem:[%s0 + $0xa10] sm:$0xff]
  %v331 = vld [vmem:[%s0 + $0xa18] sm:$0xff]
  %v332 = vld [vmem:[%s0 + $0xa20] sm:$0xff]
  %v333 = vld [vmem:[%s0 + $0xa28] sm:$0xff]
  %v334 = vld [vmem:[%s0 + $0xa30] sm:$0xff]
  %v335 = vld [vmem:[%s0 + $0xa38] sm:$0xff]
  %v336 = vld [vmem:[%s0 + $0xa40] sm:$0xff]
  %v337 = vld [vmem:[%s0 + $0xa48] sm:$0xff]
  %v338 = vld [vmem:[%s0 + $0xa50] sm:$0xff]
  %v339 = vld [vmem:[%s0 + $0xa58] sm:$0xff]
  %v340 = vld [vmem:[%s0 + $0xa60] sm:$0xff]
  %v341 = vld [vmem:[%s0 + $0xa68] sm:$0xff]
  %v342 = vld [vmem:[%s0 + $0xa70] sm:$0xff]
  %v343 = vld [vmem:[%s0 + $0xa78] sm:$0xff]
  %v344 = vld [vmem:[%s0 + $0xa80] sm:$0xff]
  %v345 = vld [vmem:[%s0 + $0xa88] sm:$0xff]
  %v346 = vld [vmem:[%s0 + $0xa90] sm:$0xff]
  %v347 = vld [vmem:[%s0 + $0xa98] sm:$0xff]
  %v348 = vld [vmem:[%s0 + $0xaa0] sm:$0xff]
  %v349 = vld [vmem:[%s0 + $0xaa8] sm:$0xff]
  %v350 = vld [vmem:[%s0 + $0xab0] sm:$0xff]
  %v351 = vld [vmem:[%s0 + $0xab8] sm:$0xff]
  %v352 = vld [vmem:[%s0 + $0xac0] sm:$0xff]
  %v353 = vld [vmem:[%s0 + $0xac8] sm:$0xff]
  %v354 = vld [vmem:[%s0 + $0xad0] sm:$0xff]
  %v355 = vld [vmem:[%s0 + $0xad8] sm:$0xff]
  %v356 = vld [vmem:[%s0 + $0xae0] sm:$0xff]
  %v357 = vld [vmem:[%s0 + $0xae8] sm:$0xff]
  %v358 = vld [vmem:[%s0 + $0xaf0] sm:$0xff]
  %v359 = vld [vmem:[%s0 + $0xaf8] sm:$0xff]
  %v360 = vld [vmem:[%s0 + $0xb00] sm:$0xff]
  %v361 = vld [vmem:[%s0 + $0xb08] sm:$0xff]
  %v362 = vld [vmem:[%s0 + $0xb10] sm:$0xff]
  %v363 = vld [vmem:[%s0 + $0xb18] sm:$0xff]
  %v364 = vld [vmem:[%s0 + $0xb20] sm:$0xff]
  %v365 = vld [vmem:[%s0 + $0xb28] sm:$0xff]
  %v366 = vld [vmem:[%s0 + $0xb30] sm:$0xff]
  %v367 = vld [vmem:[%s0 + $0xb38] sm:$0xff]
  %v368 = vld [vmem:[%s0 + $0xb40] sm:$0xff]
  %v369 = vld [vmem:[%s0 + $0xb48] sm:$0xff]
  %v370 = vld [vmem:[%s0 + $0xb50] sm:$0xff]
  %v371 = vld [vmem:[%s0 + $0xb58] sm:$0xff]
  %v372 = vld [vmem:[%s0 + $0xb60] sm:$0xff]
  %v373 = vld [vmem:[%s0 + $0xb68] sm:$0xff]
  %v374 = vld [vmem:[%s0 + $0xb70] sm:$0xff]
  %v375 = vld [vmem:[%s0 + $0xb78] sm:$0xff]
  %v376 = vld [vmem:[%s0 + $0xb80] sm:$0xff]
  %v377 = vld [vmem:[%s0 + $0xb88] sm:$0xff]
  %v378 = vld [vmem:[%s0 + $0xb90] sm:$0xff]
  %v379 = vld [vmem:[%s0 + $0xb98] sm:$0xff]
  %v380 = vld [vmem:[%s0 + $0xba0] sm:$0xff]
  %v381 = vld [vmem:[%s0 + $0xba8] sm:$0xff]
  %v382 = vld [vmem:[%s0 + $0xbb0] sm:$0xff]
  %v383 = vld [vmem:[%s0 + $0xbb8] sm:$0xff]
  %v384 = vld [vmem:[%s0 + $0xbc0] sm:$0xff]
  %v385 = vld [vmem:[%s0 + $0xbc8] sm:$0xff]
  %v386 = vld [vmem:[%s0 + $0xbd0] sm:$0xff]
  %v387 = vld [vmem:[%s0 + $0xbd8] sm:$0xff]
  %v388 = vld [vmem:[%s0 + $0xbe0] sm:$0xff]
  %v389 = vld [vmem:[%s0 + $0xbe8] sm:$0xff]
  %v390 = vld [vmem:[%s0 + $0xbf0] sm:$0xff]
  %v391 = vld [vmem:[%s0 + $0xbf8] sm:$0xff]
  %v392 = vld [vmem:[%s0 + $0xc00] sm:$0xff]
  %v393 = vld [vmem:[%s0 + $0xc08] sm:$0xff]
  %v394 = vld [vmem:[%s0 + $0xc10] sm:$0xff]
  %v395 = vld [vmem:[%s0 + $0xc18] sm:$0xff]
  %v396 = vld [vmem:[%s0 + $0xc20] sm:$0xff]
  %v397 = vld [vmem:[%s0 + $0xc28] sm:$0xff]
  %v398 = vld [vmem:[%s0 + $0xc30] sm:$0xff]
  %v399 = vld [vmem:[%s0 + $0xc38] sm:$0xff]
  %v400 = vld [vmem:[%s0 + $0xc40] sm:$0xff]
  %v401 = vld [vmem:[%s0 + $0xc48] sm:$0xff]
  %v402 = vld [vmem:[%s0 + $0xc50] sm:$0xff]
  %v403 = vld [vmem:[%s0 + $0xc58] sm:$0xff]
  %v404 = vld [vmem:[%s0 + $0xc60] sm:$0xff]
  %v405 = vld [vmem:[%s0 + $0xc68] sm:$0xff]
  %v406 = vld [vmem:[%s0 + $0xc70] sm:$0xff]
  %v407 = vld [vmem:[%s0 + $0xc78] sm:$0xff]
  %v408 = vld [vmem:[%s0 + $0xc80] sm:$0xff]
  %v409 = vld [vmem:[%s0 + $0xc88] sm:$0xff]
  %v410 = vld [vmem:[%s0 + $0xc90] sm:$0xff]
  %v411 = vld [vmem:[%s0 + $0xc98] sm:$0xff]
  %v412 = vld [vmem:[%s0 + $0xca0] sm:$0xff]
  %v413 = vld [vmem:[%s0 + $0xca8] sm:$0xff]
  %v414 = vld [vmem:[%s0 + $0xcb0] sm:$0xff]
  %v415 = vld [vmem:[%s0 + $0xcb8] sm:$0xff]
  %v416 = vld [vmem:[%s0 + $0xcc0] sm:$0xff]
  %v417 = vld [vmem:[%s0 + $0xcc8] sm:$0xff]
  %v418 = vld [vmem:[%s0 + $0xcd0] sm:$0xff]
  %v419 = vld [vmem:[%s0 + $0xcd8] sm:$0xff]
  %v420 = vld [vmem:[%s0 + $0xce0] sm:$0xff]
  %v421 = vld [vmem:[%s0 + $0xce8] sm:$0xff]
  %v422 = vld [vmem:[%s0 + $0xcf0] sm:$0xff]
  %v423 = vld [vmem:[%s0 + $0xcf8] sm:$0xff]
  %v424 = vld [vmem:[%s0 + $0xd00] sm:$0xff]
  %v425 = vld [vmem:[%s0 + $0xd08] sm:$0xff]
  %v426 = vld [vmem:[%s0 + $0xd10] sm:$0xff]
  %v427 = vld [vmem:[%s0 + $0xd18] sm:$0xff]
  %v428 = vld [vmem:[%s0 + $0xd20] sm:$0xff]
  %v429 = vld [vmem:[%s0 + $0xd28] sm:$0xff]
  %v430 = vld [vmem:[%s0 + $0xd30] sm:$0xff]
  %v431 = vld [vmem:[%s0 + $0xd38] sm:$0xff]
  %v432 = vld [vmem:[%s0 + $0xd40] sm:$0xff]
  %v433 = vld [vmem:[%s0 + $0xd48] sm:$0xff]
  %v434 = vld [vmem:[%s0 + $0xd50] sm:$0xff]
  %v435 = vld [vmem:[%s0 + $0xd58] sm:$0xff]
  %v436 = vld [vmem:[%s0 + $0xd60] sm:$0xff]
  %v437 = vld [vmem:[%s0 + $0xd68] sm:$0xff]
  %v438 = vld [vmem:[%s0 + $0xd70] sm:$0xff]
  %v439 = vld [vmem:[%s0 + $0xd78] sm:$0xff]
  %v440 = vld [vmem:[%s0 + $0xd80] sm:$0xff]
  %v441 = vld [vmem:[%s0 + $0xd88] sm:$0xff]
  %v442 = vld [vmem:[%s0 + $0xd90] sm:$0xff]
  %v443 = vld [vmem:[%s0 + $0xd98] sm:$0xff]
  %v444 = vld [vmem:[%s0 + $0xda0] sm:$0xff]
  %v445 = vld [vmem:[%s0 + $0xda8] sm:$0xff]
  %v446 = vld [vmem:[%s0 + $0xdb0] sm:$0xff]
  %v447 = vld [vmem:[%s0 + $0xdb8] sm:$0xff]
  %v448 = vld [vmem:[%s0 + $0xdc0] sm:$0xff]
  %v449 = vld [vmem:[%s0 + $0xdc8] sm:$0xff]
  %v450 = vld [vmem:[%s0 + $0xdd0] sm:$0xff]
  %v451 = vld [vmem:[%s0 + $0xdd8] sm:$0xff]
  %v452 = vld [vmem:[%s0 + $0xde0] sm:$0xff]
  %v453 = vld [vmem:[%s0 + $0xde8] sm:$0xff]
  %v454 = vld [vmem:[%s0 + $0xdf0] sm:$0xff]
  %v455 = vld [vmem:[%s0 + $0xdf8] sm:$0xff]
  %v456 = vld [vmem:[%s0 + $0xe00] sm:$0xff]
  %v457 = vld [vmem:[%s0 + $0xe08] sm:$0xff]
  %v458 = vld [vmem:[%s0 + $0xe10] sm:$0xff]
  %v459 = vld [vmem:[%s0 + $0xe18] sm:$0xff]
  %v460 = vld [vmem:[%s0 + $0xe20] sm:$0xff]
  %v461 = vld [vmem:[%s0 + $0xe28] sm:$0xff]
  %v462 = vld [vmem:[%s0 + $0xe30] sm:$0xff]
  %v463 = vld [vmem:[%s0 + $0xe38] sm:$0xff]
  %v464 = vld [vmem:[%s0 + $0xe40] sm:$0xff]
  %v465 = vld [vmem:[%s0 + $0xe48] sm:$0xff]
  %v466 = vld [vmem:[%s0 + $0xe50] sm:$0xff]
  %v467 = vld [vmem:[%s0 + $0xe58] sm:$0xff]
  %v468 = vld [vmem:[%s0 + $0xe60] sm:$0xff]
  %v469 = vld [vmem:[%s0 + $0xe68] sm:$0xff]
  %v470 = vld [vmem:[%s0 + $0xe70] sm:$0xff]
  %v471 = vld [vmem:[%s0 + $0xe78] sm:$0xff]
  %v472 = vld [vmem:[%s0 + $0xe80] sm:$0xff]
  %v473 = vld [vmem:[%s0 + $0xe88] sm:$0xff]
  %v474 = vld [vmem:[%s0 + $0xe90] sm:$0xff]
  %v475 = vld [vmem:[%s0 + $0xe98] sm:$0xff]
  %v476 = vld [vmem:[%s0 + $0xea0] sm:$0xff]
  %v477 = vld [vmem:[%s0 + $0xea8] sm:$0xff]
  %v478 = vld [vmem:[%s0 + $0xeb0] sm:$0xff]
  %v479 = vld [vmem:[%s0 + $0xeb8] sm:$0xff]
  %v480 = vld [vmem:[%s0 + $0xec0] sm:$0xff]
  %v481 = vld [vmem:[%s0 + $0xec8] sm:$0xff]
  %v482 = vld [vmem:[%s0 + $0xed0] sm:$0xff]
  %v483 = vld [vmem:[%s0 + $0xed8] sm:$0xff]
  %v484 = vld [vmem:[%s0 + $0xee0] sm:$0xff]
  %v485 = vld [vmem:[%s0 + $0xee8] sm:$0xff]
  %v486 = vld [vmem:[%s0 + $0xef0] sm:$0xff]
  %v487 = vld [vmem:[%s0 + $0xef8] sm:$0xff]
  %v488 = vld [vmem:[%s0 + $0xf00] sm:$0xff]
  %v489 = vld [vmem:[%s0 + $0xf08] sm:$0xff]
  %v490 = vld [vmem:[%s0 + $0xf10] sm:$0xff]
  %v491 = vld [vmem:[%s0 + $0xf18] sm:$0xff]
  %v492 = vld [vmem:[%s0 + $0xf20] sm:$0xff]
  %v493 = vld [vmem:[%s0 + $0xf28] sm:$0xff]
  %v494 = vld [vmem:[%s0 + $0xf30] sm:$0xff]
  %v495 = vld [vmem:[%s0 + $0xf38] sm:$0xff]
  %v496 = vld [vmem:[%s0 + $0xf40] sm:$0xff]
  %v497 = vld [vmem:[%s0 + $0xf48] sm:$0xff]
  %v498 = vld [vmem:[%s0 + $0xf50] sm:$0xff]
  %v499 = vld [vmem:[%s0 + $0xf58] sm:$0xff]
  %v500 = vld [vmem:[%s0 + $0xf60] sm:$0xff]
  %v501 = vld [vmem:[%s0 + $0xf68] sm:$0xff]
  %v502 = vld [vmem:[%s0 + $0xf70] sm:$0xff]
  %v503 = vld [vmem:[%s0 + $0xf78] sm:$0xff]
  %v504 = vld [vmem:[%s0 + $0xf80] sm:$0xff]
  %v505 = vld [vmem:[%s0 + $0xf88] sm:$0xff]
  %v506 = vld [vmem:[%s0 + $0xf90] sm:$0xff]
  %v507 = vld [vmem:[%s0 + $0xf98] sm:$0xff]
  %v508 = vld [vmem:[%s0 + $0xfa0] sm:$0xff]
  %v509 = vld [vmem:[%s0 + $0xfa8] sm:$0xff]
  %v510 = vld [vmem:[%s0 + $0xfb0] sm:$0xff]
  %v511 = vld [vmem:[%s0 + $0xfb8] sm:$0xff]
  %v512 = vld [vmem:[%s0 + $0xfc0] sm:$0xff]
  %v513 = vld [vmem:[%s0 + $0xfc8] sm:$0xff]
  %v514 = vld [vmem:[%s0 + $0xfd0] sm:$0xff]
  %v515 = vld [vmem:[%s0 + $0xfd8] sm:$0xff]
  %v516 = vld [vmem:[%s0 + $0xfe0] sm:$0xff]
  %v517 = vld [vmem:[%s0 + $0xfe8] sm:$0xff]
  %v518 = vld [vmem:[%s0 + $0xff0] sm:$0xff]
  %v519 = vld [vmem:[%s0 + $0xff8] sm:$0xff]
  %vm520 = vcmask 261120
  %v521 = vsel %vm520, %v8, -inf
  %522 = vmax.xlane.f32.xlu0 %v521
  %v523 = vpop.xlane.xlu0 %522
  %v524 = vsel %vm520, %v9, -inf
  %525 = vmax.xlane.f32.xlu0 %v524
  %v526 = vpop.xlane.xlu0 %525
  %v527 = vsel %vm520, %v10, -inf
  %528 = vmax.xlane.f32.xlu0 %v527
  %v529 = vpop.xlane.xlu0 %528
  %v530 = vsel %vm520, %v11, -inf
  %531 = vmax.xlane.f32.xlu0 %v530
  %v532 = vpop.xlane.xlu0 %531
  %v533 = vsel %vm520, %v12, -inf
  %534 = vmax.xlane.f32.xlu0 %v533
  %v535 = vpop.xlane.xlu0 %534
  %v536 = vsel %vm520, %v13, -inf
  %537 = vmax.xlane.f32.xlu0 %v536
  %v538 = vpop.xlane.xlu0 %537
  %v539 = vsel %vm520, %v14, -inf
  %540 = vmax.xlane.f32.xlu0 %v539
  %v541 = vpop.xlane.xlu0 %540
  %v542 = vsel %vm520, %v15, -inf
  %543 = vmax.xlane.f32.xlu0 %v542
  %v544 = vpop.xlane.xlu0 %543
  %v545 = vsel %vm520, %v16, -inf
  %546 = vmax.xlane.f32.xlu0 %v545
  %v547 = vpop.xlane.xlu0 %546
  %v548 = vsel %vm520, %v17, -inf
  %549 = vmax.xlane.f32.xlu0 %v548
  %v550 = vpop.xlane.xlu0 %549
  %v551 = vsel %vm520, %v18, -inf
  %552 = vmax.xlane.f32.xlu0 %v551
  %v553 = vpop.xlane.xlu0 %552
  %v554 = vsel %vm520, %v19, -inf
  %555 = vmax.xlane.f32.xlu0 %v554
  %v556 = vpop.xlane.xlu0 %555
  %v557 = vsel %vm520, %v20, -inf
  %558 = vmax.xlane.f32.xlu0 %v557
  %v559 = vpop.xlane.xlu0 %558
  %v560 = vsel %vm520, %v21, -inf
  %561 = vmax.xlane.f32.xlu0 %v560
  %v562 = vpop.xlane.xlu0 %561
  %v563 = vsel %vm520, %v22, -inf
  %564 = vmax.xlane.f32.xlu0 %v563
  %v565 = vpop.xlane.xlu0 %564
  %v566 = vsel %vm520, %v23, -inf
  %567 = vmax.xlane.f32.xlu0 %v566
  %v568 = vpop.xlane.xlu0 %567
  %v569 = vsel %vm520, %v24, -inf
  %570 = vmax.xlane.f32.xlu0 %v569
  %v571 = vpop.xlane.xlu0 %570
  %v572 = vsel %vm520, %v25, -inf
  %573 = vmax.xlane.f32.xlu0 %v572
  %v574 = vpop.xlane.xlu0 %573
  %v575 = vsel %vm520, %v26, -inf
  %576 = vmax.xlane.f32.xlu0 %v575
  %v577 = vpop.xlane.xlu0 %576
  %v578 = vsel %vm520, %v27, -inf
  %579 = vmax.xlane.f32.xlu0 %v578
  %v580 = vpop.xlane.xlu0 %579
  %v581 = vsel %vm520, %v28, -inf
  %582 = vmax.xlane.f32.xlu0 %v581
  %v583 = vpop.xlane.xlu0 %582
  %v584 = vsel %vm520, %v29, -inf
  %585 = vmax.xlane.f32.xlu0 %v584
  %v586 = vpop.xlane.xlu0 %585
  %v587 = vsel %vm520, %v30, -inf
  %588 = vmax.xlane.f32.xlu0 %v587
  %v589 = vpop.xlane.xlu0 %588
  %v590 = vsel %vm520, %v31, -inf
  %591 = vmax.xlane.f32.xlu0 %v590
  %v592 = vpop.xlane.xlu0 %591
  %v593 = vsel %vm520, %v32, -inf
  %594 = vmax.xlane.f32.xlu0 %v593
  %v595 = vpop.xlane.xlu0 %594
  %v596 = vsel %vm520, %v33, -inf
  %597 = vmax.xlane.f32.xlu0 %v596
  %v598 = vpop.xlane.xlu0 %597
  %v599 = vsel %vm520, %v34, -inf
  %600 = vmax.xlane.f32.xlu0 %v599
  %v601 = vpop.xlane.xlu0 %600
  %v602 = vsel %vm520, %v35, -inf
  %603 = vmax.xlane.f32.xlu0 %v602
  %v604 = vpop.xlane.xlu0 %603
  %v605 = vsel %vm520, %v36, -inf
  %606 = vmax.xlane.f32.xlu0 %v605
  %v607 = vpop.xlane.xlu0 %606
  %v608 = vsel %vm520, %v37, -inf
  %609 = vmax.xlane.f32.xlu0 %v608
  %v610 = vpop.xlane.xlu0 %609
  %v611 = vsel %vm520, %v38, -inf
  %612 = vmax.xlane.f32.xlu0 %v611
  %v613 = vpop.xlane.xlu0 %612
  %v614 = vsel %vm520, %v39, -inf
  %615 = vmax.xlane.f32.xlu0 %v614
  %v616 = vpop.xlane.xlu0 %615
  %v617 = vsel %vm520, %v40, -inf
  %618 = vmax.xlane.f32.xlu0 %v617
  %v619 = vpop.xlane.xlu0 %618
  %v620 = vsel %vm520, %v41, -inf
  %621 = vmax.xlane.f32.xlu0 %v620
  %v622 = vpop.xlane.xlu0 %621
  %v623 = vsel %vm520, %v42, -inf
  %624 = vmax.xlane.f32.xlu0 %v623
  %v625 = vpop.xlane.xlu0 %624
  %v626 = vsel %vm520, %v43, -inf
  %627 = vmax.xlane.f32.xlu0 %v626
  %v628 = vpop.xlane.xlu0 %627
  %v629 = vsel %vm520, %v44, -inf
  %630 = vmax.xlane.f32.xlu0 %v629
  %v631 = vpop.xlane.xlu0 %630
  %v632 = vsel %vm520, %v45, -inf
  %633 = vmax.xlane.f32.xlu0 %v632
  %v634 = vpop.xlane.xlu0 %633
  %v635 = vsel %vm520, %v46, -inf
  %636 = vmax.xlane.f32.xlu0 %v635
  %v637 = vpop.xlane.xlu0 %636
  %v638 = vsel %vm520, %v47, -inf
  %639 = vmax.xlane.f32.xlu0 %v638
  %v640 = vpop.xlane.xlu0 %639
  %v641 = vsel %vm520, %v48, -inf
  %642 = vmax.xlane.f32.xlu0 %v641
  %v643 = vpop.xlane.xlu0 %642
  %v644 = vsel %vm520, %v49, -inf
  %645 = vmax.xlane.f32.xlu0 %v644
  %v646 = vpop.xlane.xlu0 %645
  %v647 = vsel %vm520, %v50, -inf
  %648 = vmax.xlane.f32.xlu0 %v647
  %v649 = vpop.xlane.xlu0 %648
  %v650 = vsel %vm520, %v51, -inf
  %651 = vmax.xlane.f32.xlu0 %v650
  %v652 = vpop.xlane.xlu0 %651
  %v653 = vsel %vm520, %v52, -inf
  %654 = vmax.xlane.f32.xlu0 %v653
  %v655 = vpop.xlane.xlu0 %654
  %v656 = vsel %vm520, %v53, -inf
  %657 = vmax.xlane.f32.xlu0 %v656
  %v658 = vpop.xlane.xlu0 %657
  %v659 = vsel %vm520, %v54, -inf
  %660 = vmax.xlane.f32.xlu0 %v659
  %v661 = vpop.xlane.xlu0 %660
  %v662 = vsel %vm520, %v55, -inf
  %663 = vmax.xlane.f32.xlu0 %v662
  %v664 = vpop.xlane.xlu0 %663
  %v665 = vsel %vm520, %v56, -inf
  %666 = vmax.xlane.f32.xlu0 %v665
  %v667 = vpop.xlane.xlu0 %666
  %v668 = vsel %vm520, %v57, -inf
  %669 = vmax.xlane.f32.xlu0 %v668
  %v670 = vpop.xlane.xlu0 %669
  %v671 = vsel %vm520, %v58, -inf
  %672 = vmax.xlane.f32.xlu0 %v671
  %v673 = vpop.xlane.xlu0 %672
  %v674 = vsel %vm520, %v59, -inf
  %675 = vmax.xlane.f32.xlu0 %v674
  %v676 = vpop.xlane.xlu0 %675
  %v677 = vsel %vm520, %v60, -inf
  %678 = vmax.xlane.f32.xlu0 %v677
  %v679 = vpop.xlane.xlu0 %678
  %v680 = vsel %vm520, %v61, -inf
  %681 = vmax.xlane.f32.xlu0 %v680
  %v682 = vpop.xlane.xlu0 %681
  %v683 = vsel %vm520, %v62, -inf
  %684 = vmax.xlane.f32.xlu0 %v683
  %v685 = vpop.xlane.xlu0 %684
  %v686 = vsel %vm520, %v63, -inf
  %687 = vmax.xlane.f32.xlu0 %v686
  %v688 = vpop.xlane.xlu0 %687
  %v689 = vsel %vm520, %v64, -inf
  %690 = vmax.xlane.f32.xlu0 %v689
  %v691 = vpop.xlane.xlu0 %690
  %v692 = vsel %vm520, %v65, -inf
  %693 = vmax.xlane.f32.xlu0 %v692
  %v694 = vpop.xlane.xlu0 %693
  %v695 = vsel %vm520, %v66, -inf
  %696 = vmax.xlane.f32.xlu0 %v695
  %v697 = vpop.xlane.xlu0 %696
  %v698 = vsel %vm520, %v67, -inf
  %699 = vmax.xlane.f32.xlu0 %v698
  %v700 = vpop.xlane.xlu0 %699
  %v701 = vsel %vm520, %v68, -inf
  %702 = vmax.xlane.f32.xlu0 %v701
  %v703 = vpop.xlane.xlu0 %702
  %v704 = vsel %vm520, %v69, -inf
  %705 = vmax.xlane.f32.xlu0 %v704
  %v706 = vpop.xlane.xlu0 %705
  %v707 = vsel %vm520, %v70, -inf
  %708 = vmax.xlane.f32.xlu0 %v707
  %v709 = vpop.xlane.xlu0 %708
  %v710 = vsel %vm520, %v71, -inf
  %711 = vmax.xlane.f32.xlu0 %v710
  %v712 = vpop.xlane.xlu0 %711
  %v713 = vsel %vm520, %v72, -inf
  %714 = vmax.xlane.f32.xlu0 %v713
  %v715 = vpop.xlane.xlu0 %714
  %v716 = vsel %vm520, %v73, -inf
  %717 = vmax.xlane.f32.xlu0 %v716
  %v718 = vpop.xlane.xlu0 %717
  %v719 = vsel %vm520, %v74, -inf
  %720 = vmax.xlane.f32.xlu0 %v719
  %v721 = vpop.xlane.xlu0 %720
  %v722 = vsel %vm520, %v75, -inf
  %723 = vmax.xlane.f32.xlu0 %v722
  %v724 = vpop.xlane.xlu0 %723
  %v725 = vsel %vm520, %v76, -inf
  %726 = vmax.xlane.f32.xlu0 %v725
  %v727 = vpop.xlane.xlu0 %726
  %v728 = vsel %vm520, %v77, -inf
  %729 = vmax.xlane.f32.xlu0 %v728
  %v730 = vpop.xlane.xlu0 %729
  %v731 = vsel %vm520, %v78, -inf
  %732 = vmax.xlane.f32.xlu0 %v731
  %v733 = vpop.xlane.xlu0 %732
  %v734 = vsel %vm520, %v79, -inf
  %735 = vmax.xlane.f32.xlu0 %v734
  %v736 = vpop.xlane.xlu0 %735
  %v737 = vsel %vm520, %v80, -inf
  %738 = vmax.xlane.f32.xlu0 %v737
  %v739 = vpop.xlane.xlu0 %738
  %v740 = vsel %vm520, %v81, -inf
  %741 = vmax.xlane.f32.xlu0 %v740
  %v742 = vpop.xlane.xlu0 %741
  %v743 = vsel %vm520, %v82, -inf
  %744 = vmax.xlane.f32.xlu0 %v743
  %v745 = vpop.xlane.xlu0 %744
  %v746 = vsel %vm520, %v83, -inf
  %747 = vmax.xlane.f32.xlu0 %v746
  %v748 = vpop.xlane.xlu0 %747
  %v749 = vsel %vm520, %v84, -inf
  %750 = vmax.xlane.f32.xlu0 %v749
  %v751 = vpop.xlane.xlu0 %750
  %v752 = vsel %vm520, %v85, -inf
  %753 = vmax.xlane.f32.xlu0 %v752
  %v754 = vpop.xlane.xlu0 %753
  %v755 = vsel %vm520, %v86, -inf
  %756 = vmax.xlane.f32.xlu0 %v755
  %v757 = vpop.xlane.xlu0 %756
  %v758 = vsel %vm520, %v87, -inf
  %759 = vmax.xlane.f32.xlu0 %v758
  %v760 = vpop.xlane.xlu0 %759
  %v761 = vsel %vm520, %v88, -inf
  %762 = vmax.xlane.f32.xlu0 %v761
  %v763 = vpop.xlane.xlu0 %762
  %v764 = vsel %vm520, %v89, -inf
  %765 = vmax.xlane.f32.xlu0 %v764
  %v766 = vpop.xlane.xlu0 %765
  %v767 = vsel %vm520, %v90, -inf
  %768 = vmax.xlane.f32.xlu0 %v767
  %v769 = vpop.xlane.xlu0 %768
  %v770 = vsel %vm520, %v91, -inf
  %771 = vmax.xlane.f32.xlu0 %v770
  %v772 = vpop.xlane.xlu0 %771
  %v773 = vsel %vm520, %v92, -inf
  %774 = vmax.xlane.f32.xlu0 %v773
  %v775 = vpop.xlane.xlu0 %774
  %v776 = vsel %vm520, %v93, -inf
  %777 = vmax.xlane.f32.xlu0 %v776
  %v778 = vpop.xlane.xlu0 %777
  %v779 = vsel %vm520, %v94, -inf
  %780 = vmax.xlane.f32.xlu0 %v779
  %v781 = vpop.xlane.xlu0 %780
  %v782 = vsel %vm520, %v95, -inf
  %783 = vmax.xlane.f32.xlu0 %v782
  %v784 = vpop.xlane.xlu0 %783
  %v785 = vsel %vm520, %v96, -inf
  %786 = vmax.xlane.f32.xlu0 %v785
  %v787 = vpop.xlane.xlu0 %786
  %v788 = vsel %vm520, %v97, -inf
  %789 = vmax.xlane.f32.xlu0 %v788
  %v790 = vpop.xlane.xlu0 %789
  %v791 = vsel %vm520, %v98, -inf
  %792 = vmax.xlane.f32.xlu0 %v791
  %v793 = vpop.xlane.xlu0 %792
  %v794 = vsel %vm520, %v99, -inf
  %795 = vmax.xlane.f32.xlu0 %v794
  %v796 = vpop.xlane.xlu0 %795
  %v797 = vsel %vm520, %v100, -inf
  %798 = vmax.xlane.f32.xlu0 %v797
  %v799 = vpop.xlane.xlu0 %798
  %v800 = vsel %vm520, %v101, -inf
  %801 = vmax.xlane.f32.xlu0 %v800
  %v802 = vpop.xlane.xlu0 %801
  %v803 = vsel %vm520, %v102, -inf
  %804 = vmax.xlane.f32.xlu0 %v803
  %v805 = vpop.xlane.xlu0 %804
  %v806 = vsel %vm520, %v103, -inf
  %807 = vmax.xlane.f32.xlu0 %v806
  %v808 = vpop.xlane.xlu0 %807
  %v809 = vsel %vm520, %v104, -inf
  %810 = vmax.xlane.f32.xlu0 %v809
  %v811 = vpop.xlane.xlu0 %810
  %v812 = vsel %vm520, %v105, -inf
  %813 = vmax.xlane.f32.xlu0 %v812
  %v814 = vpop.xlane.xlu0 %813
  %v815 = vsel %vm520, %v106, -inf
  %816 = vmax.xlane.f32.xlu0 %v815
  %v817 = vpop.xlane.xlu0 %816
  %v818 = vsel %vm520, %v107, -inf
  %819 = vmax.xlane.f32.xlu0 %v818
  %v820 = vpop.xlane.xlu0 %819
  %v821 = vsel %vm520, %v108, -inf
  %822 = vmax.xlane.f32.xlu0 %v821
  %v823 = vpop.xlane.xlu0 %822
  %v824 = vsel %vm520, %v109, -inf
  %825 = vmax.xlane.f32.xlu0 %v824
  %v826 = vpop.xlane.xlu0 %825
  %v827 = vsel %vm520, %v110, -inf
  %828 = vmax.xlane.f32.xlu0 %v827
  %v829 = vpop.xlane.xlu0 %828
  %v830 = vsel %vm520, %v111, -inf
  %831 = vmax.xlane.f32.xlu0 %v830
  %v832 = vpop.xlane.xlu0 %831
  %v833 = vsel %vm520, %v112, -inf
  %834 = vmax.xlane.f32.xlu0 %v833
  %v835 = vpop.xlane.xlu0 %834
  %v836 = vsel %vm520, %v113, -inf
  %837 = vmax.xlane.f32.xlu0 %v836
  %v838 = vpop.xlane.xlu0 %837
  %v839 = vsel %vm520, %v114, -inf
  %840 = vmax.xlane.f32.xlu0 %v839
  %v841 = vpop.xlane.xlu0 %840
  %v842 = vsel %vm520, %v115, -inf
  %843 = vmax.xlane.f32.xlu0 %v842
  %v844 = vpop.xlane.xlu0 %843
  %v845 = vsel %vm520, %v116, -inf
  %846 = vmax.xlane.f32.xlu0 %v845
  %v847 = vpop.xlane.xlu0 %846
  %v848 = vsel %vm520, %v117, -inf
  %849 = vmax.xlane.f32.xlu0 %v848
  %v850 = vpop.xlane.xlu0 %849
  %v851 = vsel %vm520, %v118, -inf
  %852 = vmax.xlane.f32.xlu0 %v851
  %v853 = vpop.xlane.xlu0 %852
  %v854 = vsel %vm520, %v119, -inf
  %855 = vmax.xlane.f32.xlu0 %v854
  %v856 = vpop.xlane.xlu0 %855
  %v857 = vsel %vm520, %v120, -inf
  %858 = vmax.xlane.f32.xlu0 %v857
  %v859 = vpop.xlane.xlu0 %858
  %v860 = vsel %vm520, %v121, -inf
  %861 = vmax.xlane.f32.xlu0 %v860
  %v862 = vpop.xlane.xlu0 %861
  %v863 = vsel %vm520, %v122, -inf
  %864 = vmax.xlane.f32.xlu0 %v863
  %v865 = vpop.xlane.xlu0 %864
  %v866 = vsel %vm520, %v123, -inf
  %867 = vmax.xlane.f32.xlu0 %v866
  %v868 = vpop.xlane.xlu0 %867
  %v869 = vsel %vm520, %v124, -inf
  %870 = vmax.xlane.f32.xlu0 %v869
  %v871 = vpop.xlane.xlu0 %870
  %v872 = vsel %vm520, %v125, -inf
  %873 = vmax.xlane.f32.xlu0 %v872
  %v874 = vpop.xlane.xlu0 %873
  %v875 = vsel %vm520, %v126, -inf
  %876 = vmax.xlane.f32.xlu0 %v875
  %v877 = vpop.xlane.xlu0 %876
  %v878 = vsel %vm520, %v127, -inf
  %879 = vmax.xlane.f32.xlu0 %v878
  %v880 = vpop.xlane.xlu0 %879
  %v881 = vsel %vm520, %v128, -inf
  %882 = vmax.xlane.f32.xlu0 %v881
  %v883 = vpop.xlane.xlu0 %882
  %v884 = vsel %vm520, %v129, -inf
  %885 = vmax.xlane.f32.xlu0 %v884
  %v886 = vpop.xlane.xlu0 %885
  %v887 = vsel %vm520, %v130, -inf
  %888 = vmax.xlane.f32.xlu0 %v887
  %v889 = vpop.xlane.xlu0 %888
  %v890 = vsel %vm520, %v131, -inf
  %891 = vmax.xlane.f32.xlu0 %v890
  %v892 = vpop.xlane.xlu0 %891
  %v893 = vsel %vm520, %v132, -inf
  %894 = vmax.xlane.f32.xlu0 %v893
  %v895 = vpop.xlane.xlu0 %894
  %v896 = vsel %vm520, %v133, -inf
  %897 = vmax.xlane.f32.xlu0 %v896
  %v898 = vpop.xlane.xlu0 %897
  %v899 = vsel %vm520, %v134, -inf
  %900 = vmax.xlane.f32.xlu0 %v899
  %v901 = vpop.xlane.xlu0 %900
  %v902 = vsel %vm520, %v135, -inf
  %903 = vmax.xlane.f32.xlu0 %v902
  %v904 = vpop.xlane.xlu0 %903
  %v905 = vsel %vm520, %v136, -inf
  %906 = vmax.xlane.f32.xlu0 %v905
  %v907 = vpop.xlane.xlu0 %906
  %v908 = vsel %vm520, %v137, -inf
  %909 = vmax.xlane.f32.xlu0 %v908
  %v910 = vpop.xlane.xlu0 %909
  %v911 = vsel %vm520, %v138, -inf
  %912 = vmax.xlane.f32.xlu0 %v911
  %v913 = vpop.xlane.xlu0 %912
  %v914 = vsel %vm520, %v139, -inf
  %915 = vmax.xlane.f32.xlu0 %v914
  %v916 = vpop.xlane.xlu0 %915
  %v917 = vsel %vm520, %v140, -inf
  %918 = vmax.xlane.f32.xlu0 %v917
  %v919 = vpop.xlane.xlu0 %918
  %v920 = vsel %vm520, %v141, -inf
  %921 = vmax.xlane.f32.xlu0 %v920
  %v922 = vpop.xlane.xlu0 %921
  %v923 = vsel %vm520, %v142, -inf
  %924 = vmax.xlane.f32.xlu0 %v923
  %v925 = vpop.xlane.xlu0 %924
  %v926 = vsel %vm520, %v143, -inf
  %927 = vmax.xlane.f32.xlu0 %v926
  %v928 = vpop.xlane.xlu0 %927
  %v929 = vsel %vm520, %v144, -inf
  %930 = vmax.xlane.f32.xlu0 %v929
  %v931 = vpop.xlane.xlu0 %930
  %v932 = vsel %vm520, %v145, -inf
  %933 = vmax.xlane.f32.xlu0 %v932
  %v934 = vpop.xlane.xlu0 %933
  %v935 = vsel %vm520, %v146, -inf
  %936 = vmax.xlane.f32.xlu0 %v935
  %v937 = vpop.xlane.xlu0 %936
  %v938 = vsel %vm520, %v147, -inf
  %939 = vmax.xlane.f32.xlu0 %v938
  %v940 = vpop.xlane.xlu0 %939
  %v941 = vsel %vm520, %v148, -inf
  %942 = vmax.xlane.f32.xlu0 %v941
  %v943 = vpop.xlane.xlu0 %942
  %v944 = vsel %vm520, %v149, -inf
  %945 = vmax.xlane.f32.xlu0 %v944
  %v946 = vpop.xlane.xlu0 %945
  %v947 = vsel %vm520, %v150, -inf
  %948 = vmax.xlane.f32.xlu0 %v947
  %v949 = vpop.xlane.xlu0 %948
  %v950 = vsel %vm520, %v151, -inf
  %951 = vmax.xlane.f32.xlu0 %v950
  %v952 = vpop.xlane.xlu0 %951
  %v953 = vsel %vm520, %v152, -inf
  %954 = vmax.xlane.f32.xlu0 %v953
  %v955 = vpop.xlane.xlu0 %954
  %v956 = vsel %vm520, %v153, -inf
  %957 = vmax.xlane.f32.xlu0 %v956
  %v958 = vpop.xlane.xlu0 %957
  %v959 = vsel %vm520, %v154, -inf
  %960 = vmax.xlane.f32.xlu0 %v959
  %v961 = vpop.xlane.xlu0 %960
  %v962 = vsel %vm520, %v155, -inf
  %963 = vmax.xlane.f32.xlu0 %v962
  %v964 = vpop.xlane.xlu0 %963
  %v965 = vsel %vm520, %v156, -inf
  %966 = vmax.xlane.f32.xlu0 %v965
  %v967 = vpop.xlane.xlu0 %966
  %v968 = vsel %vm520, %v157, -inf
  %969 = vmax.xlane.f32.xlu0 %v968
  %v970 = vpop.xlane.xlu0 %969
  %v971 = vsel %vm520, %v158, -inf
  %972 = vmax.xlane.f32.xlu0 %v971
  %v973 = vpop.xlane.xlu0 %972
  %v974 = vsel %vm520, %v159, -inf
  %975 = vmax.xlane.f32.xlu0 %v974
  %v976 = vpop.xlane.xlu0 %975
  %v977 = vsel %vm520, %v160, -inf
  %978 = vmax.xlane.f32.xlu0 %v977
  %v979 = vpop.xlane.xlu0 %978
  %v980 = vsel %vm520, %v161, -inf
  %981 = vmax.xlane.f32.xlu0 %v980
  %v982 = vpop.xlane.xlu0 %981
  %v983 = vsel %vm520, %v162, -inf
  %984 = vmax.xlane.f32.xlu0 %v983
  %v985 = vpop.xlane.xlu0 %984
  %v986 = vsel %vm520, %v163, -inf
  %987 = vmax.xlane.f32.xlu0 %v986
  %v988 = vpop.xlane.xlu0 %987
  %v989 = vsel %vm520, %v164, -inf
  %990 = vmax.xlane.f32.xlu0 %v989
  %v991 = vpop.xlane.xlu0 %990
  %v992 = vsel %vm520, %v165, -inf
  %993 = vmax.xlane.f32.xlu0 %v992
  %v994 = vpop.xlane.xlu0 %993
  %v995 = vsel %vm520, %v166, -inf
  %996 = vmax.xlane.f32.xlu0 %v995
  %v997 = vpop.xlane.xlu0 %996
  %v998 = vsel %vm520, %v167, -inf
  %999 = vmax.xlane.f32.xlu0 %v998
  %v1000 = vpop.xlane.xlu0 %999
  %v1001 = vsel %vm520, %v168, -inf
  %1002 = vmax.xlane.f32.xlu0 %v1001
  %v1003 = vpop.xlane.xlu0 %1002
  %v1004 = vsel %vm520, %v169, -inf
  %1005 = vmax.xlane.f32.xlu0 %v1004
  %v1006 = vpop.xlane.xlu0 %1005
  %v1007 = vsel %vm520, %v170, -inf
  %1008 = vmax.xlane.f32.xlu0 %v1007
  %v1009 = vpop.xlane.xlu0 %1008
  %v1010 = vsel %vm520, %v171, -inf
  %1011 = vmax.xlane.f32.xlu0 %v1010
  %v1012 = vpop.xlane.xlu0 %1011
  %v1013 = vsel %vm520, %v172, -inf
  %1014 = vmax.xlane.f32.xlu0 %v1013
  %v1015 = vpop.xlane.xlu0 %1014
  %v1016 = vsel %vm520, %v173, -inf
  %1017 = vmax.xlane.f32.xlu0 %v1016
  %v1018 = vpop.xlane.xlu0 %1017
  %v1019 = vsel %vm520, %v174, -inf
  %1020 = vmax.xlane.f32.xlu0 %v1019
  %v1021 = vpop.xlane.xlu0 %1020
  %v1022 = vsel %vm520, %v175, -inf
  %1023 = vmax.xlane.f32.xlu0 %v1022
  %v1024 = vpop.xlane.xlu0 %1023
  %v1025 = vsel %vm520, %v176, -inf
  %1026 = vmax.xlane.f32.xlu0 %v1025
  %v1027 = vpop.xlane.xlu0 %1026
  %v1028 = vsel %vm520, %v177, -inf
  %1029 = vmax.xlane.f32.xlu0 %v1028
  %v1030 = vpop.xlane.xlu0 %1029
  %v1031 = vsel %vm520, %v178, -inf
  %1032 = vmax.xlane.f32.xlu0 %v1031
  %v1033 = vpop.xlane.xlu0 %1032
  %v1034 = vsel %vm520, %v179, -inf
  %1035 = vmax.xlane.f32.xlu0 %v1034
  %v1036 = vpop.xlane.xlu0 %1035
  %v1037 = vsel %vm520, %v180, -inf
  %1038 = vmax.xlane.f32.xlu0 %v1037
  %v1039 = vpop.xlane.xlu0 %1038
  %v1040 = vsel %vm520, %v181, -inf
  %1041 = vmax.xlane.f32.xlu0 %v1040
  %v1042 = vpop.xlane.xlu0 %1041
  %v1043 = vsel %vm520, %v182, -inf
  %1044 = vmax.xlane.f32.xlu0 %v1043
  %v1045 = vpop.xlane.xlu0 %1044
  %v1046 = vsel %vm520, %v183, -inf
  %1047 = vmax.xlane.f32.xlu0 %v1046
  %v1048 = vpop.xlane.xlu0 %1047
  %v1049 = vsel %vm520, %v184, -inf
  %1050 = vmax.xlane.f32.xlu0 %v1049
  %v1051 = vpop.xlane.xlu0 %1050
  %v1052 = vsel %vm520, %v185, -inf
  %1053 = vmax.xlane.f32.xlu0 %v1052
  %v1054 = vpop.xlane.xlu0 %1053
  %v1055 = vsel %vm520, %v186, -inf
  %1056 = vmax.xlane.f32.xlu0 %v1055
  %v1057 = vpop.xlane.xlu0 %1056
  %v1058 = vsel %vm520, %v187, -inf
  %1059 = vmax.xlane.f32.xlu0 %v1058
  %v1060 = vpop.xlane.xlu0 %1059
  %v1061 = vsel %vm520, %v188, -inf
  %1062 = vmax.xlane.f32.xlu0 %v1061
  %v1063 = vpop.xlane.xlu0 %1062
  %v1064 = vsel %vm520, %v189, -inf
  %1065 = vmax.xlane.f32.xlu0 %v1064
  %v1066 = vpop.xlane.xlu0 %1065
  %v1067 = vsel %vm520, %v190, -inf
  %1068 = vmax.xlane.f32.xlu0 %v1067
  %v1069 = vpop.xlane.xlu0 %1068
  %v1070 = vsel %vm520, %v191, -inf
  %1071 = vmax.xlane.f32.xlu0 %v1070
  %v1072 = vpop.xlane.xlu0 %1071
  %v1073 = vsel %vm520, %v192, -inf
  %1074 = vmax.xlane.f32.xlu0 %v1073
  %v1075 = vpop.xlane.xlu0 %1074
  %v1076 = vsel %vm520, %v193, -inf
  %1077 = vmax.xlane.f32.xlu0 %v1076
  %v1078 = vpop.xlane.xlu0 %1077
  %v1079 = vsel %vm520, %v194, -inf
  %1080 = vmax.xlane.f32.xlu0 %v1079
  %v1081 = vpop.xlane.xlu0 %1080
  %v1082 = vsel %vm520, %v195, -inf
  %1083 = vmax.xlane.f32.xlu0 %v1082
  %v1084 = vpop.xlane.xlu0 %1083
  %v1085 = vsel %vm520, %v196, -inf
  %1086 = vmax.xlane.f32.xlu0 %v1085
  %v1087 = vpop.xlane.xlu0 %1086
  %v1088 = vsel %vm520, %v197, -inf
  %1089 = vmax.xlane.f32.xlu0 %v1088
  %v1090 = vpop.xlane.xlu0 %1089
  %v1091 = vsel %vm520, %v198, -inf
  %1092 = vmax.xlane.f32.xlu0 %v1091
  %v1093 = vpop.xlane.xlu0 %1092
  %v1094 = vsel %vm520, %v199, -inf
  %1095 = vmax.xlane.f32.xlu0 %v1094
  %v1096 = vpop.xlane.xlu0 %1095
  %v1097 = vsel %vm520, %v200, -inf
  %1098 = vmax.xlane.f32.xlu0 %v1097
  %v1099 = vpop.xlane.xlu0 %1098
  %v1100 = vsel %vm520, %v201, -inf
  %1101 = vmax.xlane.f32.xlu0 %v1100
  %v1102 = vpop.xlane.xlu0 %1101
  %v1103 = vsel %vm520, %v202, -inf
  %1104 = vmax.xlane.f32.xlu0 %v1103
  %v1105 = vpop.xlane.xlu0 %1104
  %v1106 = vsel %vm520, %v203, -inf
  %1107 = vmax.xlane.f32.xlu0 %v1106
  %v1108 = vpop.xlane.xlu0 %1107
  %v1109 = vsel %vm520, %v204, -inf
  %1110 = vmax.xlane.f32.xlu0 %v1109
  %v1111 = vpop.xlane.xlu0 %1110
  %v1112 = vsel %vm520, %v205, -inf
  %1113 = vmax.xlane.f32.xlu0 %v1112
  %v1114 = vpop.xlane.xlu0 %1113
  %v1115 = vsel %vm520, %v206, -inf
  %1116 = vmax.xlane.f32.xlu0 %v1115
  %v1117 = vpop.xlane.xlu0 %1116
  %v1118 = vsel %vm520, %v207, -inf
  %1119 = vmax.xlane.f32.xlu0 %v1118
  %v1120 = vpop.xlane.xlu0 %1119
  %v1121 = vsel %vm520, %v208, -inf
  %1122 = vmax.xlane.f32.xlu0 %v1121
  %v1123 = vpop.xlane.xlu0 %1122
  %v1124 = vsel %vm520, %v209, -inf
  %1125 = vmax.xlane.f32.xlu0 %v1124
  %v1126 = vpop.xlane.xlu0 %1125
  %v1127 = vsel %vm520, %v210, -inf
  %1128 = vmax.xlane.f32.xlu0 %v1127
  %v1129 = vpop.xlane.xlu0 %1128
  %v1130 = vsel %vm520, %v211, -inf
  %1131 = vmax.xlane.f32.xlu0 %v1130
  %v1132 = vpop.xlane.xlu0 %1131
  %v1133 = vsel %vm520, %v212, -inf
  %1134 = vmax.xlane.f32.xlu0 %v1133
  %v1135 = vpop.xlane.xlu0 %1134
  %v1136 = vsel %vm520, %v213, -inf
  %1137 = vmax.xlane.f32.xlu0 %v1136
  %v1138 = vpop.xlane.xlu0 %1137
  %v1139 = vsel %vm520, %v214, -inf
  %1140 = vmax.xlane.f32.xlu0 %v1139
  %v1141 = vpop.xlane.xlu0 %1140
  %v1142 = vsel %vm520, %v215, -inf
  %1143 = vmax.xlane.f32.xlu0 %v1142
  %v1144 = vpop.xlane.xlu0 %1143
  %v1145 = vsel %vm520, %v216, -inf
  %1146 = vmax.xlane.f32.xlu0 %v1145
  %v1147 = vpop.xlane.xlu0 %1146
  %v1148 = vsel %vm520, %v217, -inf
  %1149 = vmax.xlane.f32.xlu0 %v1148
  %v1150 = vpop.xlane.xlu0 %1149
  %v1151 = vsel %vm520, %v218, -inf
  %1152 = vmax.xlane.f32.xlu0 %v1151
  %v1153 = vpop.xlane.xlu0 %1152
  %v1154 = vsel %vm520, %v219, -inf
  %1155 = vmax.xlane.f32.xlu0 %v1154
  %v1156 = vpop.xlane.xlu0 %1155
  %v1157 = vsel %vm520, %v220, -inf
  %1158 = vmax.xlane.f32.xlu0 %v1157
  %v1159 = vpop.xlane.xlu0 %1158
  %v1160 = vsel %vm520, %v221, -inf
  %1161 = vmax.xlane.f32.xlu0 %v1160
  %v1162 = vpop.xlane.xlu0 %1161
  %v1163 = vsel %vm520, %v222, -inf
  %1164 = vmax.xlane.f32.xlu0 %v1163
  %v1165 = vpop.xlane.xlu0 %1164
  %v1166 = vsel %vm520, %v223, -inf
  %1167 = vmax.xlane.f32.xlu0 %v1166
  %v1168 = vpop.xlane.xlu0 %1167
  %v1169 = vsel %vm520, %v224, -inf
  %1170 = vmax.xlane.f32.xlu0 %v1169
  %v1171 = vpop.xlane.xlu0 %1170
  %v1172 = vsel %vm520, %v225, -inf
  %1173 = vmax.xlane.f32.xlu0 %v1172
  %v1174 = vpop.xlane.xlu0 %1173
  %v1175 = vsel %vm520, %v226, -inf
  %1176 = vmax.xlane.f32.xlu0 %v1175
  %v1177 = vpop.xlane.xlu0 %1176
  %v1178 = vsel %vm520, %v227, -inf
  %1179 = vmax.xlane.f32.xlu0 %v1178
  %v1180 = vpop.xlane.xlu0 %1179
  %v1181 = vsel %vm520, %v228, -inf
  %1182 = vmax.xlane.f32.xlu0 %v1181
  %v1183 = vpop.xlane.xlu0 %1182
  %v1184 = vsel %vm520, %v229, -inf
  %1185 = vmax.xlane.f32.xlu0 %v1184
  %v1186 = vpop.xlane.xlu0 %1185
  %v1187 = vsel %vm520, %v230, -inf
  %1188 = vmax.xlane.f32.xlu0 %v1187
  %v1189 = vpop.xlane.xlu0 %1188
  %v1190 = vsel %vm520, %v231, -inf
  %1191 = vmax.xlane.f32.xlu0 %v1190
  %v1192 = vpop.xlane.xlu0 %1191
  %v1193 = vsel %vm520, %v232, -inf
  %1194 = vmax.xlane.f32.xlu0 %v1193
  %v1195 = vpop.xlane.xlu0 %1194
  %v1196 = vsel %vm520, %v233, -inf
  %1197 = vmax.xlane.f32.xlu0 %v1196
  %v1198 = vpop.xlane.xlu0 %1197
  %v1199 = vsel %vm520, %v234, -inf
  %1200 = vmax.xlane.f32.xlu0 %v1199
  %v1201 = vpop.xlane.xlu0 %1200
  %v1202 = vsel %vm520, %v235, -inf
  %1203 = vmax.xlane.f32.xlu0 %v1202
  %v1204 = vpop.xlane.xlu0 %1203
  %v1205 = vsel %vm520, %v236, -inf
  %1206 = vmax.xlane.f32.xlu0 %v1205
  %v1207 = vpop.xlane.xlu0 %1206
  %v1208 = vsel %vm520, %v237, -inf
  %1209 = vmax.xlane.f32.xlu0 %v1208
  %v1210 = vpop.xlane.xlu0 %1209
  %v1211 = vsel %vm520, %v238, -inf
  %1212 = vmax.xlane.f32.xlu0 %v1211
  %v1213 = vpop.xlane.xlu0 %1212
  %v1214 = vsel %vm520, %v239, -inf
  %1215 = vmax.xlane.f32.xlu0 %v1214
  %v1216 = vpop.xlane.xlu0 %1215
  %v1217 = vsel %vm520, %v240, -inf
  %1218 = vmax.xlane.f32.xlu0 %v1217
  %v1219 = vpop.xlane.xlu0 %1218
  %v1220 = vsel %vm520, %v241, -inf
  %1221 = vmax.xlane.f32.xlu0 %v1220
  %v1222 = vpop.xlane.xlu0 %1221
  %v1223 = vsel %vm520, %v242, -inf
  %1224 = vmax.xlane.f32.xlu0 %v1223
  %v1225 = vpop.xlane.xlu0 %1224
  %v1226 = vsel %vm520, %v243, -inf
  %1227 = vmax.xlane.f32.xlu0 %v1226
  %v1228 = vpop.xlane.xlu0 %1227
  %v1229 = vsel %vm520, %v244, -inf
  %1230 = vmax.xlane.f32.xlu0 %v1229
  %v1231 = vpop.xlane.xlu0 %1230
  %v1232 = vsel %vm520, %v245, -inf
  %1233 = vmax.xlane.f32.xlu0 %v1232
  %v1234 = vpop.xlane.xlu0 %1233
  %v1235 = vsel %vm520, %v246, -inf
  %1236 = vmax.xlane.f32.xlu0 %v1235
  %v1237 = vpop.xlane.xlu0 %1236
  %v1238 = vsel %vm520, %v247, -inf
  %1239 = vmax.xlane.f32.xlu0 %v1238
  %v1240 = vpop.xlane.xlu0 %1239
  %v1241 = vsel %vm520, %v248, -inf
  %1242 = vmax.xlane.f32.xlu0 %v1241
  %v1243 = vpop.xlane.xlu0 %1242
  %v1244 = vsel %vm520, %v249, -inf
  %1245 = vmax.xlane.f32.xlu0 %v1244
  %v1246 = vpop.xlane.xlu0 %1245
  %v1247 = vsel %vm520, %v250, -inf
  %1248 = vmax.xlane.f32.xlu0 %v1247
  %v1249 = vpop.xlane.xlu0 %1248
  %v1250 = vsel %vm520, %v251, -inf
  %1251 = vmax.xlane.f32.xlu0 %v1250
  %v1252 = vpop.xlane.xlu0 %1251
  %v1253 = vsel %vm520, %v252, -inf
  %1254 = vmax.xlane.f32.xlu0 %v1253
  %v1255 = vpop.xlane.xlu0 %1254
  %v1256 = vsel %vm520, %v253, -inf
  %1257 = vmax.xlane.f32.xlu0 %v1256
  %v1258 = vpop.xlane.xlu0 %1257
  %v1259 = vsel %vm520, %v254, -inf
  %1260 = vmax.xlane.f32.xlu0 %v1259
  %v1261 = vpop.xlane.xlu0 %1260
  %v1262 = vsel %vm520, %v255, -inf
  %1263 = vmax.xlane.f32.xlu0 %v1262
  %v1264 = vpop.xlane.xlu0 %1263
  %v1265 = vsel %vm520, %v256, -inf
  %1266 = vmax.xlane.f32.xlu0 %v1265
  %v1267 = vpop.xlane.xlu0 %1266
  %v1268 = vsel %vm520, %v257, -inf
  %1269 = vmax.xlane.f32.xlu0 %v1268
  %v1270 = vpop.xlane.xlu0 %1269
  %v1271 = vsel %vm520, %v258, -inf
  %1272 = vmax.xlane.f32.xlu0 %v1271
  %v1273 = vpop.xlane.xlu0 %1272
  %v1274 = vsel %vm520, %v259, -inf
  %1275 = vmax.xlane.f32.xlu0 %v1274
  %v1276 = vpop.xlane.xlu0 %1275
  %v1277 = vsel %vm520, %v260, -inf
  %1278 = vmax.xlane.f32.xlu0 %v1277
  %v1279 = vpop.xlane.xlu0 %1278
  %v1280 = vsel %vm520, %v261, -inf
  %1281 = vmax.xlane.f32.xlu0 %v1280
  %v1282 = vpop.xlane.xlu0 %1281
  %v1283 = vsel %vm520, %v262, -inf
  %1284 = vmax.xlane.f32.xlu0 %v1283
  %v1285 = vpop.xlane.xlu0 %1284
  %v1286 = vsel %vm520, %v263, -inf
  %1287 = vmax.xlane.f32.xlu0 %v1286
  %v1288 = vpop.xlane.xlu0 %1287
  %v1289 = vsel %vm520, %v264, -inf
  %1290 = vmax.xlane.f32.xlu0 %v1289
  %v1291 = vpop.xlane.xlu0 %1290
  %v1292 = vsel %vm520, %v265, -inf
  %1293 = vmax.xlane.f32.xlu0 %v1292
  %v1294 = vpop.xlane.xlu0 %1293
  %v1295 = vsel %vm520, %v266, -inf
  %1296 = vmax.xlane.f32.xlu0 %v1295
  %v1297 = vpop.xlane.xlu0 %1296
  %v1298 = vsel %vm520, %v267, -inf
  %1299 = vmax.xlane.f32.xlu0 %v1298
  %v1300 = vpop.xlane.xlu0 %1299
  %v1301 = vsel %vm520, %v268, -inf
  %1302 = vmax.xlane.f32.xlu0 %v1301
  %v1303 = vpop.xlane.xlu0 %1302
  %v1304 = vsel %vm520, %v269, -inf
  %1305 = vmax.xlane.f32.xlu0 %v1304
  %v1306 = vpop.xlane.xlu0 %1305
  %v1307 = vsel %vm520, %v270, -inf
  %1308 = vmax.xlane.f32.xlu0 %v1307
  %v1309 = vpop.xlane.xlu0 %1308
  %v1310 = vsel %vm520, %v271, -inf
  %1311 = vmax.xlane.f32.xlu0 %v1310
  %v1312 = vpop.xlane.xlu0 %1311
  %v1313 = vsel %vm520, %v272, -inf
  %1314 = vmax.xlane.f32.xlu0 %v1313
  %v1315 = vpop.xlane.xlu0 %1314
  %v1316 = vsel %vm520, %v273, -inf
  %1317 = vmax.xlane.f32.xlu0 %v1316
  %v1318 = vpop.xlane.xlu0 %1317
  %v1319 = vsel %vm520, %v274, -inf
  %1320 = vmax.xlane.f32.xlu0 %v1319
  %v1321 = vpop.xlane.xlu0 %1320
  %v1322 = vsel %vm520, %v275, -inf
  %1323 = vmax.xlane.f32.xlu0 %v1322
  %v1324 = vpop.xlane.xlu0 %1323
  %v1325 = vsel %vm520, %v276, -inf
  %1326 = vmax.xlane.f32.xlu0 %v1325
  %v1327 = vpop.xlane.xlu0 %1326
  %v1328 = vsel %vm520, %v277, -inf
  %1329 = vmax.xlane.f32.xlu0 %v1328
  %v1330 = vpop.xlane.xlu0 %1329
  %v1331 = vsel %vm520, %v278, -inf
  %1332 = vmax.xlane.f32.xlu0 %v1331
  %v1333 = vpop.xlane.xlu0 %1332
  %v1334 = vsel %vm520, %v279, -inf
  %1335 = vmax.xlane.f32.xlu0 %v1334
  %v1336 = vpop.xlane.xlu0 %1335
  %v1337 = vsel %vm520, %v280, -inf
  %1338 = vmax.xlane.f32.xlu0 %v1337
  %v1339 = vpop.xlane.xlu0 %1338
  %v1340 = vsel %vm520, %v281, -inf
  %1341 = vmax.xlane.f32.xlu0 %v1340
  %v1342 = vpop.xlane.xlu0 %1341
  %v1343 = vsel %vm520, %v282, -inf
  %1344 = vmax.xlane.f32.xlu0 %v1343
  %v1345 = vpop.xlane.xlu0 %1344
  %v1346 = vsel %vm520, %v283, -inf
  %1347 = vmax.xlane.f32.xlu0 %v1346
  %v1348 = vpop.xlane.xlu0 %1347
  %v1349 = vsel %vm520, %v284, -inf
  %1350 = vmax.xlane.f32.xlu0 %v1349
  %v1351 = vpop.xlane.xlu0 %1350
  %v1352 = vsel %vm520, %v285, -inf
  %1353 = vmax.xlane.f32.xlu0 %v1352
  %v1354 = vpop.xlane.xlu0 %1353
  %v1355 = vsel %vm520, %v286, -inf
  %1356 = vmax.xlane.f32.xlu0 %v1355
  %v1357 = vpop.xlane.xlu0 %1356
  %v1358 = vsel %vm520, %v287, -inf
  %1359 = vmax.xlane.f32.xlu0 %v1358
  %v1360 = vpop.xlane.xlu0 %1359
  %v1361 = vsel %vm520, %v288, -inf
  %1362 = vmax.xlane.f32.xlu0 %v1361
  %v1363 = vpop.xlane.xlu0 %1362
  %v1364 = vsel %vm520, %v289, -inf
  %1365 = vmax.xlane.f32.xlu0 %v1364
  %v1366 = vpop.xlane.xlu0 %1365
  %v1367 = vsel %vm520, %v290, -inf
  %1368 = vmax.xlane.f32.xlu0 %v1367
  %v1369 = vpop.xlane.xlu0 %1368
  %v1370 = vsel %vm520, %v291, -inf
  %1371 = vmax.xlane.f32.xlu0 %v1370
  %v1372 = vpop.xlane.xlu0 %1371
  %v1373 = vsel %vm520, %v292, -inf
  %1374 = vmax.xlane.f32.xlu0 %v1373
  %v1375 = vpop.xlane.xlu0 %1374
  %v1376 = vsel %vm520, %v293, -inf
  %1377 = vmax.xlane.f32.xlu0 %v1376
  %v1378 = vpop.xlane.xlu0 %1377
  %v1379 = vsel %vm520, %v294, -inf
  %1380 = vmax.xlane.f32.xlu0 %v1379
  %v1381 = vpop.xlane.xlu0 %1380
  %v1382 = vsel %vm520, %v295, -inf
  %1383 = vmax.xlane.f32.xlu0 %v1382
  %v1384 = vpop.xlane.xlu0 %1383
  %v1385 = vsel %vm520, %v296, -inf
  %1386 = vmax.xlane.f32.xlu0 %v1385
  %v1387 = vpop.xlane.xlu0 %1386
  %v1388 = vsel %vm520, %v297, -inf
  %1389 = vmax.xlane.f32.xlu0 %v1388
  %v1390 = vpop.xlane.xlu0 %1389
  %v1391 = vsel %vm520, %v298, -inf
  %1392 = vmax.xlane.f32.xlu0 %v1391
  %v1393 = vpop.xlane.xlu0 %1392
  %v1394 = vsel %vm520, %v299, -inf
  %1395 = vmax.xlane.f32.xlu0 %v1394
  %v1396 = vpop.xlane.xlu0 %1395
  %v1397 = vsel %vm520, %v300, -inf
  %1398 = vmax.xlane.f32.xlu0 %v1397
  %v1399 = vpop.xlane.xlu0 %1398
  %v1400 = vsel %vm520, %v301, -inf
  %1401 = vmax.xlane.f32.xlu0 %v1400
  %v1402 = vpop.xlane.xlu0 %1401
  %v1403 = vsel %vm520, %v302, -inf
  %1404 = vmax.xlane.f32.xlu0 %v1403
  %v1405 = vpop.xlane.xlu0 %1404
  %v1406 = vsel %vm520, %v303, -inf
  %1407 = vmax.xlane.f32.xlu0 %v1406
  %v1408 = vpop.xlane.xlu0 %1407
  %v1409 = vsel %vm520, %v304, -inf
  %1410 = vmax.xlane.f32.xlu0 %v1409
  %v1411 = vpop.xlane.xlu0 %1410
  %v1412 = vsel %vm520, %v305, -inf
  %1413 = vmax.xlane.f32.xlu0 %v1412
  %v1414 = vpop.xlane.xlu0 %1413
  %v1415 = vsel %vm520, %v306, -inf
  %1416 = vmax.xlane.f32.xlu0 %v1415
  %v1417 = vpop.xlane.xlu0 %1416
  %v1418 = vsel %vm520, %v307, -inf
  %1419 = vmax.xlane.f32.xlu0 %v1418
  %v1420 = vpop.xlane.xlu0 %1419
  %v1421 = vsel %vm520, %v308, -inf
  %1422 = vmax.xlane.f32.xlu0 %v1421
  %v1423 = vpop.xlane.xlu0 %1422
  %v1424 = vsel %vm520, %v309, -inf
  %1425 = vmax.xlane.f32.xlu0 %v1424
  %v1426 = vpop.xlane.xlu0 %1425
  %v1427 = vsel %vm520, %v310, -inf
  %1428 = vmax.xlane.f32.xlu0 %v1427
  %v1429 = vpop.xlane.xlu0 %1428
  %v1430 = vsel %vm520, %v311, -inf
  %1431 = vmax.xlane.f32.xlu0 %v1430
  %v1432 = vpop.xlane.xlu0 %1431
  %v1433 = vsel %vm520, %v312, -inf
  %1434 = vmax.xlane.f32.xlu0 %v1433
  %v1435 = vpop.xlane.xlu0 %1434
  %v1436 = vsel %vm520, %v313, -inf
  %1437 = vmax.xlane.f32.xlu0 %v1436
  %v1438 = vpop.xlane.xlu0 %1437
  %v1439 = vsel %vm520, %v314, -inf
  %1440 = vmax.xlane.f32.xlu0 %v1439
  %v1441 = vpop.xlane.xlu0 %1440
  %v1442 = vsel %vm520, %v315, -inf
  %1443 = vmax.xlane.f32.xlu0 %v1442
  %v1444 = vpop.xlane.xlu0 %1443
  %v1445 = vsel %vm520, %v316, -inf
  %1446 = vmax.xlane.f32.xlu0 %v1445
  %v1447 = vpop.xlane.xlu0 %1446
  %v1448 = vsel %vm520, %v317, -inf
  %1449 = vmax.xlane.f32.xlu0 %v1448
  %v1450 = vpop.xlane.xlu0 %1449
  %v1451 = vsel %vm520, %v318, -inf
  %1452 = vmax.xlane.f32.xlu0 %v1451
  %v1453 = vpop.xlane.xlu0 %1452
  %v1454 = vsel %vm520, %v319, -inf
  %1455 = vmax.xlane.f32.xlu0 %v1454
  %v1456 = vpop.xlane.xlu0 %1455
  %v1457 = vsel %vm520, %v320, -inf
  %1458 = vmax.xlane.f32.xlu0 %v1457
  %v1459 = vpop.xlane.xlu0 %1458
  %v1460 = vsel %vm520, %v321, -inf
  %1461 = vmax.xlane.f32.xlu0 %v1460
  %v1462 = vpop.xlane.xlu0 %1461
  %v1463 = vsel %vm520, %v322, -inf
  %1464 = vmax.xlane.f32.xlu0 %v1463
  %v1465 = vpop.xlane.xlu0 %1464
  %v1466 = vsel %vm520, %v323, -inf
  %1467 = vmax.xlane.f32.xlu0 %v1466
  %v1468 = vpop.xlane.xlu0 %1467
  %v1469 = vsel %vm520, %v324, -inf
  %1470 = vmax.xlane.f32.xlu0 %v1469
  %v1471 = vpop.xlane.xlu0 %1470
  %v1472 = vsel %vm520, %v325, -inf
  %1473 = vmax.xlane.f32.xlu0 %v1472
  %v1474 = vpop.xlane.xlu0 %1473
  %v1475 = vsel %vm520, %v326, -inf
  %1476 = vmax.xlane.f32.xlu0 %v1475
  %v1477 = vpop.xlane.xlu0 %1476
  %v1478 = vsel %vm520, %v327, -inf
  %1479 = vmax.xlane.f32.xlu0 %v1478
  %v1480 = vpop.xlane.xlu0 %1479
  %v1481 = vsel %vm520, %v328, -inf
  %1482 = vmax.xlane.f32.xlu0 %v1481
  %v1483 = vpop.xlane.xlu0 %1482
  %v1484 = vsel %vm520, %v329, -inf
  %1485 = vmax.xlane.f32.xlu0 %v1484
  %v1486 = vpop.xlane.xlu0 %1485
  %v1487 = vsel %vm520, %v330, -inf
  %1488 = vmax.xlane.f32.xlu0 %v1487
  %v1489 = vpop.xlane.xlu0 %1488
  %v1490 = vsel %vm520, %v331, -inf
  %1491 = vmax.xlane.f32.xlu0 %v1490
  %v1492 = vpop.xlane.xlu0 %1491
  %v1493 = vsel %vm520, %v332, -inf
  %1494 = vmax.xlane.f32.xlu0 %v1493
  %v1495 = vpop.xlane.xlu0 %1494
  %v1496 = vsel %vm520, %v333, -inf
  %1497 = vmax.xlane.f32.xlu0 %v1496
  %v1498 = vpop.xlane.xlu0 %1497
  %v1499 = vsel %vm520, %v334, -inf
  %1500 = vmax.xlane.f32.xlu0 %v1499
  %v1501 = vpop.xlane.xlu0 %1500
  %v1502 = vsel %vm520, %v335, -inf
  %1503 = vmax.xlane.f32.xlu0 %v1502
  %v1504 = vpop.xlane.xlu0 %1503
  %v1505 = vsel %vm520, %v336, -inf
  %1506 = vmax.xlane.f32.xlu0 %v1505
  %v1507 = vpop.xlane.xlu0 %1506
  %v1508 = vsel %vm520, %v337, -inf
  %1509 = vmax.xlane.f32.xlu0 %v1508
  %v1510 = vpop.xlane.xlu0 %1509
  %v1511 = vsel %vm520, %v338, -inf
  %1512 = vmax.xlane.f32.xlu0 %v1511
  %v1513 = vpop.xlane.xlu0 %1512
  %v1514 = vsel %vm520, %v339, -inf
  %1515 = vmax.xlane.f32.xlu0 %v1514
  %v1516 = vpop.xlane.xlu0 %1515
  %v1517 = vsel %vm520, %v340, -inf
  %1518 = vmax.xlane.f32.xlu0 %v1517
  %v1519 = vpop.xlane.xlu0 %1518
  %v1520 = vsel %vm520, %v341, -inf
  %1521 = vmax.xlane.f32.xlu0 %v1520
  %v1522 = vpop.xlane.xlu0 %1521
  %v1523 = vsel %vm520, %v342, -inf
  %1524 = vmax.xlane.f32.xlu0 %v1523
  %v1525 = vpop.xlane.xlu0 %1524
  %v1526 = vsel %vm520, %v343, -inf
  %1527 = vmax.xlane.f32.xlu0 %v1526
  %v1528 = vpop.xlane.xlu0 %1527
  %v1529 = vsel %vm520, %v344, -inf
  %1530 = vmax.xlane.f32.xlu0 %v1529
  %v1531 = vpop.xlane.xlu0 %1530
  %v1532 = vsel %vm520, %v345, -inf
  %1533 = vmax.xlane.f32.xlu0 %v1532
  %v1534 = vpop.xlane.xlu0 %1533
  %v1535 = vsel %vm520, %v346, -inf
  %1536 = vmax.xlane.f32.xlu0 %v1535
  %v1537 = vpop.xlane.xlu0 %1536
  %v1538 = vsel %vm520, %v347, -inf
  %1539 = vmax.xlane.f32.xlu0 %v1538
  %v1540 = vpop.xlane.xlu0 %1539
  %v1541 = vsel %vm520, %v348, -inf
  %1542 = vmax.xlane.f32.xlu0 %v1541
  %v1543 = vpop.xlane.xlu0 %1542
  %v1544 = vsel %vm520, %v349, -inf
  %1545 = vmax.xlane.f32.xlu0 %v1544
  %v1546 = vpop.xlane.xlu0 %1545
  %v1547 = vsel %vm520, %v350, -inf
  %1548 = vmax.xlane.f32.xlu0 %v1547
  %v1549 = vpop.xlane.xlu0 %1548
  %v1550 = vsel %vm520, %v351, -inf
  %1551 = vmax.xlane.f32.xlu0 %v1550
  %v1552 = vpop.xlane.xlu0 %1551
  %v1553 = vsel %vm520, %v352, -inf
  %1554 = vmax.xlane.f32.xlu0 %v1553
  %v1555 = vpop.xlane.xlu0 %1554
  %v1556 = vsel %vm520, %v353, -inf
  %1557 = vmax.xlane.f32.xlu0 %v1556
  %v1558 = vpop.xlane.xlu0 %1557
  %v1559 = vsel %vm520, %v354, -inf
  %1560 = vmax.xlane.f32.xlu0 %v1559
  %v1561 = vpop.xlane.xlu0 %1560
  %v1562 = vsel %vm520, %v355, -inf
  %1563 = vmax.xlane.f32.xlu0 %v1562
  %v1564 = vpop.xlane.xlu0 %1563
  %v1565 = vsel %vm520, %v356, -inf
  %1566 = vmax.xlane.f32.xlu0 %v1565
  %v1567 = vpop.xlane.xlu0 %1566
  %v1568 = vsel %vm520, %v357, -inf
  %1569 = vmax.xlane.f32.xlu0 %v1568
  %v1570 = vpop.xlane.xlu0 %1569
  %v1571 = vsel %vm520, %v358, -inf
  %1572 = vmax.xlane.f32.xlu0 %v1571
  %v1573 = vpop.xlane.xlu0 %1572
  %v1574 = vsel %vm520, %v359, -inf
  %1575 = vmax.xlane.f32.xlu0 %v1574
  %v1576 = vpop.xlane.xlu0 %1575
  %v1577 = vsel %vm520, %v360, -inf
  %1578 = vmax.xlane.f32.xlu0 %v1577
  %v1579 = vpop.xlane.xlu0 %1578
  %v1580 = vsel %vm520, %v361, -inf
  %1581 = vmax.xlane.f32.xlu0 %v1580
  %v1582 = vpop.xlane.xlu0 %1581
  %v1583 = vsel %vm520, %v362, -inf
  %1584 = vmax.xlane.f32.xlu0 %v1583
  %v1585 = vpop.xlane.xlu0 %1584
  %v1586 = vsel %vm520, %v363, -inf
  %1587 = vmax.xlane.f32.xlu0 %v1586
  %v1588 = vpop.xlane.xlu0 %1587
  %v1589 = vsel %vm520, %v364, -inf
  %1590 = vmax.xlane.f32.xlu0 %v1589
  %v1591 = vpop.xlane.xlu0 %1590
  %v1592 = vsel %vm520, %v365, -inf
  %1593 = vmax.xlane.f32.xlu0 %v1592
  %v1594 = vpop.xlane.xlu0 %1593
  %v1595 = vsel %vm520, %v366, -inf
  %1596 = vmax.xlane.f32.xlu0 %v1595
  %v1597 = vpop.xlane.xlu0 %1596
  %v1598 = vsel %vm520, %v367, -inf
  %1599 = vmax.xlane.f32.xlu0 %v1598
  %v1600 = vpop.xlane.xlu0 %1599
  %v1601 = vsel %vm520, %v368, -inf
  %1602 = vmax.xlane.f32.xlu0 %v1601
  %v1603 = vpop.xlane.xlu0 %1602
  %v1604 = vsel %vm520, %v369, -inf
  %1605 = vmax.xlane.f32.xlu0 %v1604
  %v1606 = vpop.xlane.xlu0 %1605
  %v1607 = vsel %vm520, %v370, -inf
  %1608 = vmax.xlane.f32.xlu0 %v1607
  %v1609 = vpop.xlane.xlu0 %1608
  %v1610 = vsel %vm520, %v371, -inf
  %1611 = vmax.xlane.f32.xlu0 %v1610
  %v1612 = vpop.xlane.xlu0 %1611
  %v1613 = vsel %vm520, %v372, -inf
  %1614 = vmax.xlane.f32.xlu0 %v1613
  %v1615 = vpop.xlane.xlu0 %1614
  %v1616 = vsel %vm520, %v373, -inf
  %1617 = vmax.xlane.f32.xlu0 %v1616
  %v1618 = vpop.xlane.xlu0 %1617
  %v1619 = vsel %vm520, %v374, -inf
  %1620 = vmax.xlane.f32.xlu0 %v1619
  %v1621 = vpop.xlane.xlu0 %1620
  %v1622 = vsel %vm520, %v375, -inf
  %1623 = vmax.xlane.f32.xlu0 %v1622
  %v1624 = vpop.xlane.xlu0 %1623
  %v1625 = vsel %vm520, %v376, -inf
  %1626 = vmax.xlane.f32.xlu0 %v1625
  %v1627 = vpop.xlane.xlu0 %1626
  %v1628 = vsel %vm520, %v377, -inf
  %1629 = vmax.xlane.f32.xlu0 %v1628
  %v1630 = vpop.xlane.xlu0 %1629
  %v1631 = vsel %vm520, %v378, -inf
  %1632 = vmax.xlane.f32.xlu0 %v1631
  %v1633 = vpop.xlane.xlu0 %1632
  %v1634 = vsel %vm520, %v379, -inf
  %1635 = vmax.xlane.f32.xlu0 %v1634
  %v1636 = vpop.xlane.xlu0 %1635
  %v1637 = vsel %vm520, %v380, -inf
  %1638 = vmax.xlane.f32.xlu0 %v1637
  %v1639 = vpop.xlane.xlu0 %1638
  %v1640 = vsel %vm520, %v381, -inf
  %1641 = vmax.xlane.f32.xlu0 %v1640
  %v1642 = vpop.xlane.xlu0 %1641
  %v1643 = vsel %vm520, %v382, -inf
  %1644 = vmax.xlane.f32.xlu0 %v1643
  %v1645 = vpop.xlane.xlu0 %1644
  %v1646 = vsel %vm520, %v383, -inf
  %1647 = vmax.xlane.f32.xlu0 %v1646
  %v1648 = vpop.xlane.xlu0 %1647
  %v1649 = vsel %vm520, %v384, -inf
  %1650 = vmax.xlane.f32.xlu0 %v1649
  %v1651 = vpop.xlane.xlu0 %1650
  %v1652 = vsel %vm520, %v385, -inf
  %1653 = vmax.xlane.f32.xlu0 %v1652
  %v1654 = vpop.xlane.xlu0 %1653
  %v1655 = vsel %vm520, %v386, -inf
  %1656 = vmax.xlane.f32.xlu0 %v1655
  %v1657 = vpop.xlane.xlu0 %1656
  %v1658 = vsel %vm520, %v387, -inf
  %1659 = vmax.xlane.f32.xlu0 %v1658
  %v1660 = vpop.xlane.xlu0 %1659
  %v1661 = vsel %vm520, %v388, -inf
  %1662 = vmax.xlane.f32.xlu0 %v1661
  %v1663 = vpop.xlane.xlu0 %1662
  %v1664 = vsel %vm520, %v389, -inf
  %1665 = vmax.xlane.f32.xlu0 %v1664
  %v1666 = vpop.xlane.xlu0 %1665
  %v1667 = vsel %vm520, %v390, -inf
  %1668 = vmax.xlane.f32.xlu0 %v1667
  %v1669 = vpop.xlane.xlu0 %1668
  %v1670 = vsel %vm520, %v391, -inf
  %1671 = vmax.xlane.f32.xlu0 %v1670
  %v1672 = vpop.xlane.xlu0 %1671
  %v1673 = vsel %vm520, %v392, -inf
  %1674 = vmax.xlane.f32.xlu0 %v1673
  %v1675 = vpop.xlane.xlu0 %1674
  %v1676 = vsel %vm520, %v393, -inf
  %1677 = vmax.xlane.f32.xlu0 %v1676
  %v1678 = vpop.xlane.xlu0 %1677
  %v1679 = vsel %vm520, %v394, -inf
  %1680 = vmax.xlane.f32.xlu0 %v1679
  %v1681 = vpop.xlane.xlu0 %1680
  %v1682 = vsel %vm520, %v395, -inf
  %1683 = vmax.xlane.f32.xlu0 %v1682
  %v1684 = vpop.xlane.xlu0 %1683
  %v1685 = vsel %vm520, %v396, -inf
  %1686 = vmax.xlane.f32.xlu0 %v1685
  %v1687 = vpop.xlane.xlu0 %1686
  %v1688 = vsel %vm520, %v397, -inf
  %1689 = vmax.xlane.f32.xlu0 %v1688
  %v1690 = vpop.xlane.xlu0 %1689
  %v1691 = vsel %vm520, %v398, -inf
  %1692 = vmax.xlane.f32.xlu0 %v1691
  %v1693 = vpop.xlane.xlu0 %1692
  %v1694 = vsel %vm520, %v399, -inf
  %1695 = vmax.xlane.f32.xlu0 %v1694
  %v1696 = vpop.xlane.xlu0 %1695
  %v1697 = vsel %vm520, %v400, -inf
  %1698 = vmax.xlane.f32.xlu0 %v1697
  %v1699 = vpop.xlane.xlu0 %1698
  %v1700 = vsel %vm520, %v401, -inf
  %1701 = vmax.xlane.f32.xlu0 %v1700
  %v1702 = vpop.xlane.xlu0 %1701
  %v1703 = vsel %vm520, %v402, -inf
  %1704 = vmax.xlane.f32.xlu0 %v1703
  %v1705 = vpop.xlane.xlu0 %1704
  %v1706 = vsel %vm520, %v403, -inf
  %1707 = vmax.xlane.f32.xlu0 %v1706
  %v1708 = vpop.xlane.xlu0 %1707
  %v1709 = vsel %vm520, %v404, -inf
  %1710 = vmax.xlane.f32.xlu0 %v1709
  %v1711 = vpop.xlane.xlu0 %1710
  %v1712 = vsel %vm520, %v405, -inf
  %1713 = vmax.xlane.f32.xlu0 %v1712
  %v1714 = vpop.xlane.xlu0 %1713
  %v1715 = vsel %vm520, %v406, -inf
  %1716 = vmax.xlane.f32.xlu0 %v1715
  %v1717 = vpop.xlane.xlu0 %1716
  %v1718 = vsel %vm520, %v407, -inf
  %1719 = vmax.xlane.f32.xlu0 %v1718
  %v1720 = vpop.xlane.xlu0 %1719
  %v1721 = vsel %vm520, %v408, -inf
  %1722 = vmax.xlane.f32.xlu0 %v1721
  %v1723 = vpop.xlane.xlu0 %1722
  %v1724 = vsel %vm520, %v409, -inf
  %1725 = vmax.xlane.f32.xlu0 %v1724
  %v1726 = vpop.xlane.xlu0 %1725
  %v1727 = vsel %vm520, %v410, -inf
  %1728 = vmax.xlane.f32.xlu0 %v1727
  %v1729 = vpop.xlane.xlu0 %1728
  %v1730 = vsel %vm520, %v411, -inf
  %1731 = vmax.xlane.f32.xlu0 %v1730
  %v1732 = vpop.xlane.xlu0 %1731
  %v1733 = vsel %vm520, %v412, -inf
  %1734 = vmax.xlane.f32.xlu0 %v1733
  %v1735 = vpop.xlane.xlu0 %1734
  %v1736 = vsel %vm520, %v413, -inf
  %1737 = vmax.xlane.f32.xlu0 %v1736
  %v1738 = vpop.xlane.xlu0 %1737
  %v1739 = vsel %vm520, %v414, -inf
  %1740 = vmax.xlane.f32.xlu0 %v1739
  %v1741 = vpop.xlane.xlu0 %1740
  %v1742 = vsel %vm520, %v415, -inf
  %1743 = vmax.xlane.f32.xlu0 %v1742
  %v1744 = vpop.xlane.xlu0 %1743
  %v1745 = vsel %vm520, %v416, -inf
  %1746 = vmax.xlane.f32.xlu0 %v1745
  %v1747 = vpop.xlane.xlu0 %1746
  %v1748 = vsel %vm520, %v417, -inf
  %1749 = vmax.xlane.f32.xlu0 %v1748
  %v1750 = vpop.xlane.xlu0 %1749
  %v1751 = vsel %vm520, %v418, -inf
  %1752 = vmax.xlane.f32.xlu0 %v1751
  %v1753 = vpop.xlane.xlu0 %1752
  %v1754 = vsel %vm520, %v419, -inf
  %1755 = vmax.xlane.f32.xlu0 %v1754
  %v1756 = vpop.xlane.xlu0 %1755
  %v1757 = vsel %vm520, %v420, -inf
  %1758 = vmax.xlane.f32.xlu0 %v1757
  %v1759 = vpop.xlane.xlu0 %1758
  %v1760 = vsel %vm520, %v421, -inf
  %1761 = vmax.xlane.f32.xlu0 %v1760
  %v1762 = vpop.xlane.xlu0 %1761
  %v1763 = vsel %vm520, %v422, -inf
  %1764 = vmax.xlane.f32.xlu0 %v1763
  %v1765 = vpop.xlane.xlu0 %1764
  %v1766 = vsel %vm520, %v423, -inf
  %1767 = vmax.xlane.f32.xlu0 %v1766
  %v1768 = vpop.xlane.xlu0 %1767
  %v1769 = vsel %vm520, %v424, -inf
  %1770 = vmax.xlane.f32.xlu0 %v1769
  %v1771 = vpop.xlane.xlu0 %1770
  %v1772 = vsel %vm520, %v425, -inf
  %1773 = vmax.xlane.f32.xlu0 %v1772
  %v1774 = vpop.xlane.xlu0 %1773
  %v1775 = vsel %vm520, %v426, -inf
  %1776 = vmax.xlane.f32.xlu0 %v1775
  %v1777 = vpop.xlane.xlu0 %1776
  %v1778 = vsel %vm520, %v427, -inf
  %1779 = vmax.xlane.f32.xlu0 %v1778
  %v1780 = vpop.xlane.xlu0 %1779
  %v1781 = vsel %vm520, %v428, -inf
  %1782 = vmax.xlane.f32.xlu0 %v1781
  %v1783 = vpop.xlane.xlu0 %1782
  %v1784 = vsel %vm520, %v429, -inf
  %1785 = vmax.xlane.f32.xlu0 %v1784
  %v1786 = vpop.xlane.xlu0 %1785
  %v1787 = vsel %vm520, %v430, -inf
  %1788 = vmax.xlane.f32.xlu0 %v1787
  %v1789 = vpop.xlane.xlu0 %1788
  %v1790 = vsel %vm520, %v431, -inf
  %1791 = vmax.xlane.f32.xlu0 %v1790
  %v1792 = vpop.xlane.xlu0 %1791
  %v1793 = vsel %vm520, %v432, -inf
  %1794 = vmax.xlane.f32.xlu0 %v1793
  %v1795 = vpop.xlane.xlu0 %1794
  %v1796 = vsel %vm520, %v433, -inf
  %1797 = vmax.xlane.f32.xlu0 %v1796
  %v1798 = vpop.xlane.xlu0 %1797
  %v1799 = vsel %vm520, %v434, -inf
  %1800 = vmax.xlane.f32.xlu0 %v1799
  %v1801 = vpop.xlane.xlu0 %1800
  %v1802 = vsel %vm520, %v435, -inf
  %1803 = vmax.xlane.f32.xlu0 %v1802
  %v1804 = vpop.xlane.xlu0 %1803
  %v1805 = vsel %vm520, %v436, -inf
  %1806 = vmax.xlane.f32.xlu0 %v1805
  %v1807 = vpop.xlane.xlu0 %1806
  %v1808 = vsel %vm520, %v437, -inf
  %1809 = vmax.xlane.f32.xlu0 %v1808
  %v1810 = vpop.xlane.xlu0 %1809
  %v1811 = vsel %vm520, %v438, -inf
  %1812 = vmax.xlane.f32.xlu0 %v1811
  %v1813 = vpop.xlane.xlu0 %1812
  %v1814 = vsel %vm520, %v439, -inf
  %1815 = vmax.xlane.f32.xlu0 %v1814
  %v1816 = vpop.xlane.xlu0 %1815
  %v1817 = vsel %vm520, %v440, -inf
  %1818 = vmax.xlane.f32.xlu0 %v1817
  %v1819 = vpop.xlane.xlu0 %1818
  %v1820 = vsel %vm520, %v441, -inf
  %1821 = vmax.xlane.f32.xlu0 %v1820
  %v1822 = vpop.xlane.xlu0 %1821
  %v1823 = vsel %vm520, %v442, -inf
  %1824 = vmax.xlane.f32.xlu0 %v1823
  %v1825 = vpop.xlane.xlu0 %1824
  %v1826 = vsel %vm520, %v443, -inf
  %1827 = vmax.xlane.f32.xlu0 %v1826
  %v1828 = vpop.xlane.xlu0 %1827
  %v1829 = vsel %vm520, %v444, -inf
  %1830 = vmax.xlane.f32.xlu0 %v1829
  %v1831 = vpop.xlane.xlu0 %1830
  %v1832 = vsel %vm520, %v445, -inf
  %1833 = vmax.xlane.f32.xlu0 %v1832
  %v1834 = vpop.xlane.xlu0 %1833
  %v1835 = vsel %vm520, %v446, -inf
  %1836 = vmax.xlane.f32.xlu0 %v1835
  %v1837 = vpop.xlane.xlu0 %1836
  %v1838 = vsel %vm520, %v447, -inf
  %1839 = vmax.xlane.f32.xlu0 %v1838
  %v1840 = vpop.xlane.xlu0 %1839
  %v1841 = vsel %vm520, %v448, -inf
  %1842 = vmax.xlane.f32.xlu0 %v1841
  %v1843 = vpop.xlane.xlu0 %1842
  %v1844 = vsel %vm520, %v449, -inf
  %1845 = vmax.xlane.f32.xlu0 %v1844
  %v1846 = vpop.xlane.xlu0 %1845
  %v1847 = vsel %vm520, %v450, -inf
  %1848 = vmax.xlane.f32.xlu0 %v1847
  %v1849 = vpop.xlane.xlu0 %1848
  %v1850 = vsel %vm520, %v451, -inf
  %1851 = vmax.xlane.f32.xlu0 %v1850
  %v1852 = vpop.xlane.xlu0 %1851
  %v1853 = vsel %vm520, %v452, -inf
  %1854 = vmax.xlane.f32.xlu0 %v1853
  %v1855 = vpop.xlane.xlu0 %1854
  %v1856 = vsel %vm520, %v453, -inf
  %1857 = vmax.xlane.f32.xlu0 %v1856
  %v1858 = vpop.xlane.xlu0 %1857
  %v1859 = vsel %vm520, %v454, -inf
  %1860 = vmax.xlane.f32.xlu0 %v1859
  %v1861 = vpop.xlane.xlu0 %1860
  %v1862 = vsel %vm520, %v455, -inf
  %1863 = vmax.xlane.f32.xlu0 %v1862
  %v1864 = vpop.xlane.xlu0 %1863
  %v1865 = vsel %vm520, %v456, -inf
  %1866 = vmax.xlane.f32.xlu0 %v1865
  %v1867 = vpop.xlane.xlu0 %1866
  %v1868 = vsel %vm520, %v457, -inf
  %1869 = vmax.xlane.f32.xlu0 %v1868
  %v1870 = vpop.xlane.xlu0 %1869
  %v1871 = vsel %vm520, %v458, -inf
  %1872 = vmax.xlane.f32.xlu0 %v1871
  %v1873 = vpop.xlane.xlu0 %1872
  %v1874 = vsel %vm520, %v459, -inf
  %1875 = vmax.xlane.f32.xlu0 %v1874
  %v1876 = vpop.xlane.xlu0 %1875
  %v1877 = vsel %vm520, %v460, -inf
  %1878 = vmax.xlane.f32.xlu0 %v1877
  %v1879 = vpop.xlane.xlu0 %1878
  %v1880 = vsel %vm520, %v461, -inf
  %1881 = vmax.xlane.f32.xlu0 %v1880
  %v1882 = vpop.xlane.xlu0 %1881
  %v1883 = vsel %vm520, %v462, -inf
  %1884 = vmax.xlane.f32.xlu0 %v1883
  %v1885 = vpop.xlane.xlu0 %1884
  %v1886 = vsel %vm520, %v463, -inf
  %1887 = vmax.xlane.f32.xlu0 %v1886
  %v1888 = vpop.xlane.xlu0 %1887
  %v1889 = vsel %vm520, %v464, -inf
  %1890 = vmax.xlane.f32.xlu0 %v1889
  %v1891 = vpop.xlane.xlu0 %1890
  %v1892 = vsel %vm520, %v465, -inf
  %1893 = vmax.xlane.f32.xlu0 %v1892
  %v1894 = vpop.xlane.xlu0 %1893
  %v1895 = vsel %vm520, %v466, -inf
  %1896 = vmax.xlane.f32.xlu0 %v1895
  %v1897 = vpop.xlane.xlu0 %1896
  %v1898 = vsel %vm520, %v467, -inf
  %1899 = vmax.xlane.f32.xlu0 %v1898
  %v1900 = vpop.xlane.xlu0 %1899
  %v1901 = vsel %vm520, %v468, -inf
  %1902 = vmax.xlane.f32.xlu0 %v1901
  %v1903 = vpop.xlane.xlu0 %1902
  %v1904 = vsel %vm520, %v469, -inf
  %1905 = vmax.xlane.f32.xlu0 %v1904
  %v1906 = vpop.xlane.xlu0 %1905
  %v1907 = vsel %vm520, %v470, -inf
  %1908 = vmax.xlane.f32.xlu0 %v1907
  %v1909 = vpop.xlane.xlu0 %1908
  %v1910 = vsel %vm520, %v471, -inf
  %1911 = vmax.xlane.f32.xlu0 %v1910
  %v1912 = vpop.xlane.xlu0 %1911
  %v1913 = vsel %vm520, %v472, -inf
  %1914 = vmax.xlane.f32.xlu0 %v1913
  %v1915 = vpop.xlane.xlu0 %1914
  %v1916 = vsel %vm520, %v473, -inf
  %1917 = vmax.xlane.f32.xlu0 %v1916
  %v1918 = vpop.xlane.xlu0 %1917
  %v1919 = vsel %vm520, %v474, -inf
  %1920 = vmax.xlane.f32.xlu0 %v1919
  %v1921 = vpop.xlane.xlu0 %1920
  %v1922 = vsel %vm520, %v475, -inf
  %1923 = vmax.xlane.f32.xlu0 %v1922
  %v1924 = vpop.xlane.xlu0 %1923
  %v1925 = vsel %vm520, %v476, -inf
  %1926 = vmax.xlane.f32.xlu0 %v1925
  %v1927 = vpop.xlane.xlu0 %1926
  %v1928 = vsel %vm520, %v477, -inf
  %1929 = vmax.xlane.f32.xlu0 %v1928
  %v1930 = vpop.xlane.xlu0 %1929
  %v1931 = vsel %vm520, %v478, -inf
  %1932 = vmax.xlane.f32.xlu0 %v1931
  %v1933 = vpop.xlane.xlu0 %1932
  %v1934 = vsel %vm520, %v479, -inf
  %1935 = vmax.xlane.f32.xlu0 %v1934
  %v1936 = vpop.xlane.xlu0 %1935
  %v1937 = vsel %vm520, %v480, -inf
  %1938 = vmax.xlane.f32.xlu0 %v1937
  %v1939 = vpop.xlane.xlu0 %1938
  %v1940 = vsel %vm520, %v481, -inf
  %1941 = vmax.xlane.f32.xlu0 %v1940
  %v1942 = vpop.xlane.xlu0 %1941
  %v1943 = vsel %vm520, %v482, -inf
  %1944 = vmax.xlane.f32.xlu0 %v1943
  %v1945 = vpop.xlane.xlu0 %1944
  %v1946 = vsel %vm520, %v483, -inf
  %1947 = vmax.xlane.f32.xlu0 %v1946
  %v1948 = vpop.xlane.xlu0 %1947
  %v1949 = vsel %vm520, %v484, -inf
  %1950 = vmax.xlane.f32.xlu0 %v1949
  %v1951 = vpop.xlane.xlu0 %1950
  %v1952 = vsel %vm520, %v485, -inf
  %1953 = vmax.xlane.f32.xlu0 %v1952
  %v1954 = vpop.xlane.xlu0 %1953
  %v1955 = vsel %vm520, %v486, -inf
  %1956 = vmax.xlane.f32.xlu0 %v1955
  %v1957 = vpop.xlane.xlu0 %1956
  %v1958 = vsel %vm520, %v487, -inf
  %1959 = vmax.xlane.f32.xlu0 %v1958
  %v1960 = vpop.xlane.xlu0 %1959
  %v1961 = vsel %vm520, %v488, -inf
  %1962 = vmax.xlane.f32.xlu0 %v1961
  %v1963 = vpop.xlane.xlu0 %1962
  %v1964 = vsel %vm520, %v489, -inf
  %1965 = vmax.xlane.f32.xlu0 %v1964
  %v1966 = vpop.xlane.xlu0 %1965
  %v1967 = vsel %vm520, %v490, -inf
  %1968 = vmax.xlane.f32.xlu0 %v1967
  %v1969 = vpop.xlane.xlu0 %1968
  %v1970 = vsel %vm520, %v491, -inf
  %1971 = vmax.xlane.f32.xlu0 %v1970
  %v1972 = vpop.xlane.xlu0 %1971
  %v1973 = vsel %vm520, %v492, -inf
  %1974 = vmax.xlane.f32.xlu0 %v1973
  %v1975 = vpop.xlane.xlu0 %1974
  %v1976 = vsel %vm520, %v493, -inf
  %1977 = vmax.xlane.f32.xlu0 %v1976
  %v1978 = vpop.xlane.xlu0 %1977
  %v1979 = vsel %vm520, %v494, -inf
  %1980 = vmax.xlane.f32.xlu0 %v1979
  %v1981 = vpop.xlane.xlu0 %1980
  %v1982 = vsel %vm520, %v495, -inf
  %1983 = vmax.xlane.f32.xlu0 %v1982
  %v1984 = vpop.xlane.xlu0 %1983
  %v1985 = vsel %vm520, %v496, -inf
  %1986 = vmax.xlane.f32.xlu0 %v1985
  %v1987 = vpop.xlane.xlu0 %1986
  %v1988 = vsel %vm520, %v497, -inf
  %1989 = vmax.xlane.f32.xlu0 %v1988
  %v1990 = vpop.xlane.xlu0 %1989
  %v1991 = vsel %vm520, %v498, -inf
  %1992 = vmax.xlane.f32.xlu0 %v1991
  %v1993 = vpop.xlane.xlu0 %1992
  %v1994 = vsel %vm520, %v499, -inf
  %1995 = vmax.xlane.f32.xlu0 %v1994
  %v1996 = vpop.xlane.xlu0 %1995
  %v1997 = vsel %vm520, %v500, -inf
  %1998 = vmax.xlane.f32.xlu0 %v1997
  %v1999 = vpop.xlane.xlu0 %1998
  %v2000 = vsel %vm520, %v501, -inf
  %2001 = vmax.xlane.f32.xlu0 %v2000
  %v2002 = vpop.xlane.xlu0 %2001
  %v2003 = vsel %vm520, %v502, -inf
  %2004 = vmax.xlane.f32.xlu0 %v2003
  %v2005 = vpop.xlane.xlu0 %2004
  %v2006 = vsel %vm520, %v503, -inf
  %2007 = vmax.xlane.f32.xlu0 %v2006
  %v2008 = vpop.xlane.xlu0 %2007
  %v2009 = vsel %vm520, %v504, -inf
  %2010 = vmax.xlane.f32.xlu0 %v2009
  %v2011 = vpop.xlane.xlu0 %2010
  %v2012 = vsel %vm520, %v505, -inf
  %2013 = vmax.xlane.f32.xlu0 %v2012
  %v2014 = vpop.xlane.xlu0 %2013
  %v2015 = vsel %vm520, %v506, -inf
  %2016 = vmax.xlane.f32.xlu0 %v2015
  %v2017 = vpop.xlane.xlu0 %2016
  %v2018 = vsel %vm520, %v507, -inf
  %2019 = vmax.xlane.f32.xlu0 %v2018
  %v2020 = vpop.xlane.xlu0 %2019
  %v2021 = vsel %vm520, %v508, -inf
  %2022 = vmax.xlane.f32.xlu0 %v2021
  %v2023 = vpop.xlane.xlu0 %2022
  %v2024 = vsel %vm520, %v509, -inf
  %2025 = vmax.xlane.f32.xlu0 %v2024
  %v2026 = vpop.xlane.xlu0 %2025
  %v2027 = vsel %vm520, %v510, -inf
  %2028 = vmax.xlane.f32.xlu0 %v2027
  %v2029 = vpop.xlane.xlu0 %2028
  %v2030 = vsel %vm520, %v511, -inf
  %2031 = vmax.xlane.f32.xlu0 %v2030
  %v2032 = vpop.xlane.xlu0 %2031
  %v2033 = vsel %vm520, %v512, -inf
  %2034 = vmax.xlane.f32.xlu0 %v2033
  %v2035 = vpop.xlane.xlu0 %2034
  %v2036 = vsel %vm520, %v513, -inf
  %2037 = vmax.xlane.f32.xlu0 %v2036
  %v2038 = vpop.xlane.xlu0 %2037
  %v2039 = vsel %vm520, %v514, -inf
  %2040 = vmax.xlane.f32.xlu0 %v2039
  %v2041 = vpop.xlane.xlu0 %2040
  %v2042 = vsel %vm520, %v515, -inf
  %2043 = vmax.xlane.f32.xlu0 %v2042
  %v2044 = vpop.xlane.xlu0 %2043
  %v2045 = vsel %vm520, %v516, -inf
  %2046 = vmax.xlane.f32.xlu0 %v2045
  %v2047 = vpop.xlane.xlu0 %2046
  %v2048 = vsel %vm520, %v517, -inf
  %2049 = vmax.xlane.f32.xlu0 %v2048
  %v2050 = vpop.xlane.xlu0 %2049
  %v2051 = vsel %vm520, %v518, -inf
  %2052 = vmax.xlane.f32.xlu0 %v2051
  %v2053 = vpop.xlane.xlu0 %2052
  %v2054 = vsel %vm520, %v519, -inf
  %2055 = vmax.xlane.f32.xlu0 %v2054
  %v2056 = vpop.xlane.xlu0 %2055
  %vm2057 = vcmask 7168
  %2058 = vst.msk [vmem:[%s1] sm:$0xff] %vm2057, %v523
  %2059 = vst.msk [vmem:[%s1 + $0x8] sm:$0xff] %vm2057, %v526
  %2060 = vst.msk [vmem:[%s1 + $0x10] sm:$0xff] %vm2057, %v529
  %2061 = vst.msk [vmem:[%s1 + $0x18] sm:$0xff] %vm2057, %v532
  %2062 = vst.msk [vmem:[%s1 + $0x20] sm:$0xff] %vm2057, %v535
  %2063 = vst.msk [vmem:[%s1 + $0x28] sm:$0xff] %vm2057, %v538
  %2064 = vst.msk [vmem:[%s1 + $0x30] sm:$0xff] %vm2057, %v541
  %2065 = vst.msk [vmem:[%s1 + $0x38] sm:$0xff] %vm2057, %v544
  %2066 = vst.msk [vmem:[%s1 + $0x40] sm:$0xff] %vm2057, %v547
  %2067 = vst.msk [vmem:[%s1 + $0x48] sm:$0xff] %vm2057, %v550
  %2068 = vst.msk [vmem:[%s1 + $0x50] sm:$0xff] %vm2057, %v553
  %2069 = vst.msk [vmem:[%s1 + $0x58] sm:$0xff] %vm2057, %v556
  %2070 = vst.msk [vmem:[%s1 + $0x60] sm:$0xff] %vm2057, %v559
  %2071 = vst.msk [vmem:[%s1 + $0x68] sm:$0xff] %vm2057, %v562
  %2072 = vst.msk [vmem:[%s1 + $0x70] sm:$0xff] %vm2057, %v565
  %2073 = vst.msk [vmem:[%s1 + $0x78] sm:$0xff] %vm2057, %v568
  %2074 = vst.msk [vmem:[%s1 + $0x80] sm:$0xff] %vm2057, %v571
  %2075 = vst.msk [vmem:[%s1 + $0x88] sm:$0xff] %vm2057, %v574
  %2076 = vst.msk [vmem:[%s1 + $0x90] sm:$0xff] %vm2057, %v577
  %2077 = vst.msk [vmem:[%s1 + $0x98] sm:$0xff] %vm2057, %v580
  %2078 = vst.msk [vmem:[%s1 + $0xa0] sm:$0xff] %vm2057, %v583
  %2079 = vst.msk [vmem:[%s1 + $0xa8] sm:$0xff] %vm2057, %v586
  %2080 = vst.msk [vmem:[%s1 + $0xb0] sm:$0xff] %vm2057, %v589
  %2081 = vst.msk [vmem:[%s1 + $0xb8] sm:$0xff] %vm2057, %v592
  %2082 = vst.msk [vmem:[%s1 + $0xc0] sm:$0xff] %vm2057, %v595
  %2083 = vst.msk [vmem:[%s1 + $0xc8] sm:$0xff] %vm2057, %v598
  %2084 = vst.msk [vmem:[%s1 + $0xd0] sm:$0xff] %vm2057, %v601
  %2085 = vst.msk [vmem:[%s1 + $0xd8] sm:$0xff] %vm2057, %v604
  %2086 = vst.msk [vmem:[%s1 + $0xe0] sm:$0xff] %vm2057, %v607
  %2087 = vst.msk [vmem:[%s1 + $0xe8] sm:$0xff] %vm2057, %v610
  %2088 = vst.msk [vmem:[%s1 + $0xf0] sm:$0xff] %vm2057, %v613
  %2089 = vst.msk [vmem:[%s1 + $0xf8] sm:$0xff] %vm2057, %v616
  %2090 = vst.msk [vmem:[%s1 + $0x100] sm:$0xff] %vm2057, %v619
  %2091 = vst.msk [vmem:[%s1 + $0x108] sm:$0xff] %vm2057, %v622
  %2092 = vst.msk [vmem:[%s1 + $0x110] sm:$0xff] %vm2057, %v625
  %2093 = vst.msk [vmem:[%s1 + $0x118] sm:$0xff] %vm2057, %v628
  %2094 = vst.msk [vmem:[%s1 + $0x120] sm:$0xff] %vm2057, %v631
  %2095 = vst.msk [vmem:[%s1 + $0x128] sm:$0xff] %vm2057, %v634
  %2096 = vst.msk [vmem:[%s1 + $0x130] sm:$0xff] %vm2057, %v637
  %2097 = vst.msk [vmem:[%s1 + $0x138] sm:$0xff] %vm2057, %v640
  %2098 = vst.msk [vmem:[%s1 + $0x140] sm:$0xff] %vm2057, %v643
  %2099 = vst.msk [vmem:[%s1 + $0x148] sm:$0xff] %vm2057, %v646
  %2100 = vst.msk [vmem:[%s1 + $0x150] sm:$0xff] %vm2057, %v649
  %2101 = vst.msk [vmem:[%s1 + $0x158] sm:$0xff] %vm2057, %v652
  %2102 = vst.msk [vmem:[%s1 + $0x160] sm:$0xff] %vm2057, %v655
  %2103 = vst.msk [vmem:[%s1 + $0x168] sm:$0xff] %vm2057, %v658
  %2104 = vst.msk [vmem:[%s1 + $0x170] sm:$0xff] %vm2057, %v661
  %2105 = vst.msk [vmem:[%s1 + $0x178] sm:$0xff] %vm2057, %v664
  %2106 = vst.msk [vmem:[%s1 + $0x180] sm:$0xff] %vm2057, %v667
  %2107 = vst.msk [vmem:[%s1 + $0x188] sm:$0xff] %vm2057, %v670
  %2108 = vst.msk [vmem:[%s1 + $0x190] sm:$0xff] %vm2057, %v673
  %2109 = vst.msk [vmem:[%s1 + $0x198] sm:$0xff] %vm2057, %v676
  %2110 = vst.msk [vmem:[%s1 + $0x1a0] sm:$0xff] %vm2057, %v679
  %2111 = vst.msk [vmem:[%s1 + $0x1a8] sm:$0xff] %vm2057, %v682
  %2112 = vst.msk [vmem:[%s1 + $0x1b0] sm:$0xff] %vm2057, %v685
  %2113 = vst.msk [vmem:[%s1 + $0x1b8] sm:$0xff] %vm2057, %v688
  %2114 = vst.msk [vmem:[%s1 + $0x1c0] sm:$0xff] %vm2057, %v691
  %2115 = vst.msk [vmem:[%s1 + $0x1c8] sm:$0xff] %vm2057, %v694
  %2116 = vst.msk [vmem:[%s1 + $0x1d0] sm:$0xff] %vm2057, %v697
  %2117 = vst.msk [vmem:[%s1 + $0x1d8] sm:$0xff] %vm2057, %v700
  %2118 = vst.msk [vmem:[%s1 + $0x1e0] sm:$0xff] %vm2057, %v703
  %2119 = vst.msk [vmem:[%s1 + $0x1e8] sm:$0xff] %vm2057, %v706
  %2120 = vst.msk [vmem:[%s1 + $0x1f0] sm:$0xff] %vm2057, %v709
  %2121 = vst.msk [vmem:[%s1 + $0x1f8] sm:$0xff] %vm2057, %v712
  %2122 = vst.msk [vmem:[%s1 + $0x200] sm:$0xff] %vm2057, %v715
  %2123 = vst.msk [vmem:[%s1 + $0x208] sm:$0xff] %vm2057, %v718
  %2124 = vst.msk [vmem:[%s1 + $0x210] sm:$0xff] %vm2057, %v721
  %2125 = vst.msk [vmem:[%s1 + $0x218] sm:$0xff] %vm2057, %v724
  %2126 = vst.msk [vmem:[%s1 + $0x220] sm:$0xff] %vm2057, %v727
  %2127 = vst.msk [vmem:[%s1 + $0x228] sm:$0xff] %vm2057, %v730
  %2128 = vst.msk [vmem:[%s1 + $0x230] sm:$0xff] %vm2057, %v733
  %2129 = vst.msk [vmem:[%s1 + $0x238] sm:$0xff] %vm2057, %v736
  %2130 = vst.msk [vmem:[%s1 + $0x240] sm:$0xff] %vm2057, %v739
  %2131 = vst.msk [vmem:[%s1 + $0x248] sm:$0xff] %vm2057, %v742
  %2132 = vst.msk [vmem:[%s1 + $0x250] sm:$0xff] %vm2057, %v745
  %2133 = vst.msk [vmem:[%s1 + $0x258] sm:$0xff] %vm2057, %v748
  %2134 = vst.msk [vmem:[%s1 + $0x260] sm:$0xff] %vm2057, %v751
  %2135 = vst.msk [vmem:[%s1 + $0x268] sm:$0xff] %vm2057, %v754
  %2136 = vst.msk [vmem:[%s1 + $0x270] sm:$0xff] %vm2057, %v757
  %2137 = vst.msk [vmem:[%s1 + $0x278] sm:$0xff] %vm2057, %v760
  %2138 = vst.msk [vmem:[%s1 + $0x280] sm:$0xff] %vm2057, %v763
  %2139 = vst.msk [vmem:[%s1 + $0x288] sm:$0xff] %vm2057, %v766
  %2140 = vst.msk [vmem:[%s1 + $0x290] sm:$0xff] %vm2057, %v769
  %2141 = vst.msk [vmem:[%s1 + $0x298] sm:$0xff] %vm2057, %v772
  %2142 = vst.msk [vmem:[%s1 + $0x2a0] sm:$0xff] %vm2057, %v775
  %2143 = vst.msk [vmem:[%s1 + $0x2a8] sm:$0xff] %vm2057, %v778
  %2144 = vst.msk [vmem:[%s1 + $0x2b0] sm:$0xff] %vm2057, %v781
  %2145 = vst.msk [vmem:[%s1 + $0x2b8] sm:$0xff] %vm2057, %v784
  %2146 = vst.msk [vmem:[%s1 + $0x2c0] sm:$0xff] %vm2057, %v787
  %2147 = vst.msk [vmem:[%s1 + $0x2c8] sm:$0xff] %vm2057, %v790
  %2148 = vst.msk [vmem:[%s1 + $0x2d0] sm:$0xff] %vm2057, %v793
  %2149 = vst.msk [vmem:[%s1 + $0x2d8] sm:$0xff] %vm2057, %v796
  %2150 = vst.msk [vmem:[%s1 + $0x2e0] sm:$0xff] %vm2057, %v799
  %2151 = vst.msk [vmem:[%s1 + $0x2e8] sm:$0xff] %vm2057, %v802
  %2152 = vst.msk [vmem:[%s1 + $0x2f0] sm:$0xff] %vm2057, %v805
  %2153 = vst.msk [vmem:[%s1 + $0x2f8] sm:$0xff] %vm2057, %v808
  %2154 = vst.msk [vmem:[%s1 + $0x300] sm:$0xff] %vm2057, %v811
  %2155 = vst.msk [vmem:[%s1 + $0x308] sm:$0xff] %vm2057, %v814
  %2156 = vst.msk [vmem:[%s1 + $0x310] sm:$0xff] %vm2057, %v817
  %2157 = vst.msk [vmem:[%s1 + $0x318] sm:$0xff] %vm2057, %v820
  %2158 = vst.msk [vmem:[%s1 + $0x320] sm:$0xff] %vm2057, %v823
  %2159 = vst.msk [vmem:[%s1 + $0x328] sm:$0xff] %vm2057, %v826
  %2160 = vst.msk [vmem:[%s1 + $0x330] sm:$0xff] %vm2057, %v829
  %2161 = vst.msk [vmem:[%s1 + $0x338] sm:$0xff] %vm2057, %v832
  %2162 = vst.msk [vmem:[%s1 + $0x340] sm:$0xff] %vm2057, %v835
  %2163 = vst.msk [vmem:[%s1 + $0x348] sm:$0xff] %vm2057, %v838
  %2164 = vst.msk [vmem:[%s1 + $0x350] sm:$0xff] %vm2057, %v841
  %2165 = vst.msk [vmem:[%s1 + $0x358] sm:$0xff] %vm2057, %v844
  %2166 = vst.msk [vmem:[%s1 + $0x360] sm:$0xff] %vm2057, %v847
  %2167 = vst.msk [vmem:[%s1 + $0x368] sm:$0xff] %vm2057, %v850
  %2168 = vst.msk [vmem:[%s1 + $0x370] sm:$0xff] %vm2057, %v853
  %2169 = vst.msk [vmem:[%s1 + $0x378] sm:$0xff] %vm2057, %v856
  %2170 = vst.msk [vmem:[%s1 + $0x380] sm:$0xff] %vm2057, %v859
  %2171 = vst.msk [vmem:[%s1 + $0x388] sm:$0xff] %vm2057, %v862
  %2172 = vst.msk [vmem:[%s1 + $0x390] sm:$0xff] %vm2057, %v865
  %2173 = vst.msk [vmem:[%s1 + $0x398] sm:$0xff] %vm2057, %v868
  %2174 = vst.msk [vmem:[%s1 + $0x3a0] sm:$0xff] %vm2057, %v871
  %2175 = vst.msk [vmem:[%s1 + $0x3a8] sm:$0xff] %vm2057, %v874
  %2176 = vst.msk [vmem:[%s1 + $0x3b0] sm:$0xff] %vm2057, %v877
  %2177 = vst.msk [vmem:[%s1 + $0x3b8] sm:$0xff] %vm2057, %v880
  %2178 = vst.msk [vmem:[%s1 + $0x3c0] sm:$0xff] %vm2057, %v883
  %2179 = vst.msk [vmem:[%s1 + $0x3c8] sm:$0xff] %vm2057, %v886
  %2180 = vst.msk [vmem:[%s1 + $0x3d0] sm:$0xff] %vm2057, %v889
  %2181 = vst.msk [vmem:[%s1 + $0x3d8] sm:$0xff] %vm2057, %v892
  %2182 = vst.msk [vmem:[%s1 + $0x3e0] sm:$0xff] %vm2057, %v895
  %2183 = vst.msk [vmem:[%s1 + $0x3e8] sm:$0xff] %vm2057, %v898
  %2184 = vst.msk [vmem:[%s1 + $0x3f0] sm:$0xff] %vm2057, %v901
  %2185 = vst.msk [vmem:[%s1 + $0x3f8] sm:$0xff] %vm2057, %v904
  %2186 = vst.msk [vmem:[%s1 + $0x400] sm:$0xff] %vm2057, %v907
  %2187 = vst.msk [vmem:[%s1 + $0x408] sm:$0xff] %vm2057, %v910
  %2188 = vst.msk [vmem:[%s1 + $0x410] sm:$0xff] %vm2057, %v913
  %2189 = vst.msk [vmem:[%s1 + $0x418] sm:$0xff] %vm2057, %v916
  %2190 = vst.msk [vmem:[%s1 + $0x420] sm:$0xff] %vm2057, %v919
  %2191 = vst.msk [vmem:[%s1 + $0x428] sm:$0xff] %vm2057, %v922
  %2192 = vst.msk [vmem:[%s1 + $0x430] sm:$0xff] %vm2057, %v925
  %2193 = vst.msk [vmem:[%s1 + $0x438] sm:$0xff] %vm2057, %v928
  %2194 = vst.msk [vmem:[%s1 + $0x440] sm:$0xff] %vm2057, %v931
  %2195 = vst.msk [vmem:[%s1 + $0x448] sm:$0xff] %vm2057, %v934
  %2196 = vst.msk [vmem:[%s1 + $0x450] sm:$0xff] %vm2057, %v937
  %2197 = vst.msk [vmem:[%s1 + $0x458] sm:$0xff] %vm2057, %v940
  %2198 = vst.msk [vmem:[%s1 + $0x460] sm:$0xff] %vm2057, %v943
  %2199 = vst.msk [vmem:[%s1 + $0x468] sm:$0xff] %vm2057, %v946
  %2200 = vst.msk [vmem:[%s1 + $0x470] sm:$0xff] %vm2057, %v949
  %2201 = vst.msk [vmem:[%s1 + $0x478] sm:$0xff] %vm2057, %v952
  %2202 = vst.msk [vmem:[%s1 + $0x480] sm:$0xff] %vm2057, %v955
  %2203 = vst.msk [vmem:[%s1 + $0x488] sm:$0xff] %vm2057, %v958
  %2204 = vst.msk [vmem:[%s1 + $0x490] sm:$0xff] %vm2057, %v961
  %2205 = vst.msk [vmem:[%s1 + $0x498] sm:$0xff] %vm2057, %v964
  %2206 = vst.msk [vmem:[%s1 + $0x4a0] sm:$0xff] %vm2057, %v967
  %2207 = vst.msk [vmem:[%s1 + $0x4a8] sm:$0xff] %vm2057, %v970
  %2208 = vst.msk [vmem:[%s1 + $0x4b0] sm:$0xff] %vm2057, %v973
  %2209 = vst.msk [vmem:[%s1 + $0x4b8] sm:$0xff] %vm2057, %v976
  %2210 = vst.msk [vmem:[%s1 + $0x4c0] sm:$0xff] %vm2057, %v979
  %2211 = vst.msk [vmem:[%s1 + $0x4c8] sm:$0xff] %vm2057, %v982
  %2212 = vst.msk [vmem:[%s1 + $0x4d0] sm:$0xff] %vm2057, %v985
  %2213 = vst.msk [vmem:[%s1 + $0x4d8] sm:$0xff] %vm2057, %v988
  %2214 = vst.msk [vmem:[%s1 + $0x4e0] sm:$0xff] %vm2057, %v991
  %2215 = vst.msk [vmem:[%s1 + $0x4e8] sm:$0xff] %vm2057, %v994
  %2216 = vst.msk [vmem:[%s1 + $0x4f0] sm:$0xff] %vm2057, %v997
  %2217 = vst.msk [vmem:[%s1 + $0x4f8] sm:$0xff] %vm2057, %v1000
  %2218 = vst.msk [vmem:[%s1 + $0x500] sm:$0xff] %vm2057, %v1003
  %2219 = vst.msk [vmem:[%s1 + $0x508] sm:$0xff] %vm2057, %v1006
  %2220 = vst.msk [vmem:[%s1 + $0x510] sm:$0xff] %vm2057, %v1009
  %2221 = vst.msk [vmem:[%s1 + $0x518] sm:$0xff] %vm2057, %v1012
  %2222 = vst.msk [vmem:[%s1 + $0x520] sm:$0xff] %vm2057, %v1015
  %2223 = vst.msk [vmem:[%s1 + $0x528] sm:$0xff] %vm2057, %v1018
  %2224 = vst.msk [vmem:[%s1 + $0x530] sm:$0xff] %vm2057, %v1021
  %2225 = vst.msk [vmem:[%s1 + $0x538] sm:$0xff] %vm2057, %v1024
  %2226 = vst.msk [vmem:[%s1 + $0x540] sm:$0xff] %vm2057, %v1027
  %2227 = vst.msk [vmem:[%s1 + $0x548] sm:$0xff] %vm2057, %v1030
  %2228 = vst.msk [vmem:[%s1 + $0x550] sm:$0xff] %vm2057, %v1033
  %2229 = vst.msk [vmem:[%s1 + $0x558] sm:$0xff] %vm2057, %v1036
  %2230 = vst.msk [vmem:[%s1 + $0x560] sm:$0xff] %vm2057, %v1039
  %2231 = vst.msk [vmem:[%s1 + $0x568] sm:$0xff] %vm2057, %v1042
  %2232 = vst.msk [vmem:[%s1 + $0x570] sm:$0xff] %vm2057, %v1045
  %2233 = vst.msk [vmem:[%s1 + $0x578] sm:$0xff] %vm2057, %v1048
  %2234 = vst.msk [vmem:[%s1 + $0x580] sm:$0xff] %vm2057, %v1051
  %2235 = vst.msk [vmem:[%s1 + $0x588] sm:$0xff] %vm2057, %v1054
  %2236 = vst.msk [vmem:[%s1 + $0x590] sm:$0xff] %vm2057, %v1057
  %2237 = vst.msk [vmem:[%s1 + $0x598] sm:$0xff] %vm2057, %v1060
  %2238 = vst.msk [vmem:[%s1 + $0x5a0] sm:$0xff] %vm2057, %v1063
  %2239 = vst.msk [vmem:[%s1 + $0x5a8] sm:$0xff] %vm2057, %v1066
  %2240 = vst.msk [vmem:[%s1 + $0x5b0] sm:$0xff] %vm2057, %v1069
  %2241 = vst.msk [vmem:[%s1 + $0x5b8] sm:$0xff] %vm2057, %v1072
  %2242 = vst.msk [vmem:[%s1 + $0x5c0] sm:$0xff] %vm2057, %v1075
  %2243 = vst.msk [vmem:[%s1 + $0x5c8] sm:$0xff] %vm2057, %v1078
  %2244 = vst.msk [vmem:[%s1 + $0x5d0] sm:$0xff] %vm2057, %v1081
  %2245 = vst.msk [vmem:[%s1 + $0x5d8] sm:$0xff] %vm2057, %v1084
  %2246 = vst.msk [vmem:[%s1 + $0x5e0] sm:$0xff] %vm2057, %v1087
  %2247 = vst.msk [vmem:[%s1 + $0x5e8] sm:$0xff] %vm2057, %v1090
  %2248 = vst.msk [vmem:[%s1 + $0x5f0] sm:$0xff] %vm2057, %v1093
  %2249 = vst.msk [vmem:[%s1 + $0x5f8] sm:$0xff] %vm2057, %v1096
  %2250 = vst.msk [vmem:[%s1 + $0x600] sm:$0xff] %vm2057, %v1099
  %2251 = vst.msk [vmem:[%s1 + $0x608] sm:$0xff] %vm2057, %v1102
  %2252 = vst.msk [vmem:[%s1 + $0x610] sm:$0xff] %vm2057, %v1105
  %2253 = vst.msk [vmem:[%s1 + $0x618] sm:$0xff] %vm2057, %v1108
  %2254 = vst.msk [vmem:[%s1 + $0x620] sm:$0xff] %vm2057, %v1111
  %2255 = vst.msk [vmem:[%s1 + $0x628] sm:$0xff] %vm2057, %v1114
  %2256 = vst.msk [vmem:[%s1 + $0x630] sm:$0xff] %vm2057, %v1117
  %2257 = vst.msk [vmem:[%s1 + $0x638] sm:$0xff] %vm2057, %v1120
  %2258 = vst.msk [vmem:[%s1 + $0x640] sm:$0xff] %vm2057, %v1123
  %2259 = vst.msk [vmem:[%s1 + $0x648] sm:$0xff] %vm2057, %v1126
  %2260 = vst.msk [vmem:[%s1 + $0x650] sm:$0xff] %vm2057, %v1129
  %2261 = vst.msk [vmem:[%s1 + $0x658] sm:$0xff] %vm2057, %v1132
  %2262 = vst.msk [vmem:[%s1 + $0x660] sm:$0xff] %vm2057, %v1135
  %2263 = vst.msk [vmem:[%s1 + $0x668] sm:$0xff] %vm2057, %v1138
  %2264 = vst.msk [vmem:[%s1 + $0x670] sm:$0xff] %vm2057, %v1141
  %2265 = vst.msk [vmem:[%s1 + $0x678] sm:$0xff] %vm2057, %v1144
  %2266 = vst.msk [vmem:[%s1 + $0x680] sm:$0xff] %vm2057, %v1147
  %2267 = vst.msk [vmem:[%s1 + $0x688] sm:$0xff] %vm2057, %v1150
  %2268 = vst.msk [vmem:[%s1 + $0x690] sm:$0xff] %vm2057, %v1153
  %2269 = vst.msk [vmem:[%s1 + $0x698] sm:$0xff] %vm2057, %v1156
  %2270 = vst.msk [vmem:[%s1 + $0x6a0] sm:$0xff] %vm2057, %v1159
  %2271 = vst.msk [vmem:[%s1 + $0x6a8] sm:$0xff] %vm2057, %v1162
  %2272 = vst.msk [vmem:[%s1 + $0x6b0] sm:$0xff] %vm2057, %v1165
  %2273 = vst.msk [vmem:[%s1 + $0x6b8] sm:$0xff] %vm2057, %v1168
  %2274 = vst.msk [vmem:[%s1 + $0x6c0] sm:$0xff] %vm2057, %v1171
  %2275 = vst.msk [vmem:[%s1 + $0x6c8] sm:$0xff] %vm2057, %v1174
  %2276 = vst.msk [vmem:[%s1 + $0x6d0] sm:$0xff] %vm2057, %v1177
  %2277 = vst.msk [vmem:[%s1 + $0x6d8] sm:$0xff] %vm2057, %v1180
  %2278 = vst.msk [vmem:[%s1 + $0x6e0] sm:$0xff] %vm2057, %v1183
  %2279 = vst.msk [vmem:[%s1 + $0x6e8] sm:$0xff] %vm2057, %v1186
  %2280 = vst.msk [vmem:[%s1 + $0x6f0] sm:$0xff] %vm2057, %v1189
  %2281 = vst.msk [vmem:[%s1 + $0x6f8] sm:$0xff] %vm2057, %v1192
  %2282 = vst.msk [vmem:[%s1 + $0x700] sm:$0xff] %vm2057, %v1195
  %2283 = vst.msk [vmem:[%s1 + $0x708] sm:$0xff] %vm2057, %v1198
  %2284 = vst.msk [vmem:[%s1 + $0x710] sm:$0xff] %vm2057, %v1201
  %2285 = vst.msk [vmem:[%s1 + $0x718] sm:$0xff] %vm2057, %v1204
  %2286 = vst.msk [vmem:[%s1 + $0x720] sm:$0xff] %vm2057, %v1207
  %2287 = vst.msk [vmem:[%s1 + $0x728] sm:$0xff] %vm2057, %v1210
  %2288 = vst.msk [vmem:[%s1 + $0x730] sm:$0xff] %vm2057, %v1213
  %2289 = vst.msk [vmem:[%s1 + $0x738] sm:$0xff] %vm2057, %v1216
  %2290 = vst.msk [vmem:[%s1 + $0x740] sm:$0xff] %vm2057, %v1219
  %2291 = vst.msk [vmem:[%s1 + $0x748] sm:$0xff] %vm2057, %v1222
  %2292 = vst.msk [vmem:[%s1 + $0x750] sm:$0xff] %vm2057, %v1225
  %2293 = vst.msk [vmem:[%s1 + $0x758] sm:$0xff] %vm2057, %v1228
  %2294 = vst.msk [vmem:[%s1 + $0x760] sm:$0xff] %vm2057, %v1231
  %2295 = vst.msk [vmem:[%s1 + $0x768] sm:$0xff] %vm2057, %v1234
  %2296 = vst.msk [vmem:[%s1 + $0x770] sm:$0xff] %vm2057, %v1237
  %2297 = vst.msk [vmem:[%s1 + $0x778] sm:$0xff] %vm2057, %v1240
  %2298 = vst.msk [vmem:[%s1 + $0x780] sm:$0xff] %vm2057, %v1243
  %2299 = vst.msk [vmem:[%s1 + $0x788] sm:$0xff] %vm2057, %v1246
  %2300 = vst.msk [vmem:[%s1 + $0x790] sm:$0xff] %vm2057, %v1249
  %2301 = vst.msk [vmem:[%s1 + $0x798] sm:$0xff] %vm2057, %v1252
  %2302 = vst.msk [vmem:[%s1 + $0x7a0] sm:$0xff] %vm2057, %v1255
  %2303 = vst.msk [vmem:[%s1 + $0x7a8] sm:$0xff] %vm2057, %v1258
  %2304 = vst.msk [vmem:[%s1 + $0x7b0] sm:$0xff] %vm2057, %v1261
  %2305 = vst.msk [vmem:[%s1 + $0x7b8] sm:$0xff] %vm2057, %v1264
  %2306 = vst.msk [vmem:[%s1 + $0x7c0] sm:$0xff] %vm2057, %v1267
  %2307 = vst.msk [vmem:[%s1 + $0x7c8] sm:$0xff] %vm2057, %v1270
  %2308 = vst.msk [vmem:[%s1 + $0x7d0] sm:$0xff] %vm2057, %v1273
  %2309 = vst.msk [vmem:[%s1 + $0x7d8] sm:$0xff] %vm2057, %v1276
  %2310 = vst.msk [vmem:[%s1 + $0x7e0] sm:$0xff] %vm2057, %v1279
  %2311 = vst.msk [vmem:[%s1 + $0x7e8] sm:$0xff] %vm2057, %v1282
  %2312 = vst.msk [vmem:[%s1 + $0x7f0] sm:$0xff] %vm2057, %v1285
  %2313 = vst.msk [vmem:[%s1 + $0x7f8] sm:$0xff] %vm2057, %v1288
  %2314 = vst.msk [vmem:[%s1 + $0x800] sm:$0xff] %vm2057, %v1291
  %2315 = vst.msk [vmem:[%s1 + $0x808] sm:$0xff] %vm2057, %v1294
  %2316 = vst.msk [vmem:[%s1 + $0x810] sm:$0xff] %vm2057, %v1297
  %2317 = vst.msk [vmem:[%s1 + $0x818] sm:$0xff] %vm2057, %v1300
  %2318 = vst.msk [vmem:[%s1 + $0x820] sm:$0xff] %vm2057, %v1303
  %2319 = vst.msk [vmem:[%s1 + $0x828] sm:$0xff] %vm2057, %v1306
  %2320 = vst.msk [vmem:[%s1 + $0x830] sm:$0xff] %vm2057, %v1309
  %2321 = vst.msk [vmem:[%s1 + $0x838] sm:$0xff] %vm2057, %v1312
  %2322 = vst.msk [vmem:[%s1 + $0x840] sm:$0xff] %vm2057, %v1315
  %2323 = vst.msk [vmem:[%s1 + $0x848] sm:$0xff] %vm2057, %v1318
  %2324 = vst.msk [vmem:[%s1 + $0x850] sm:$0xff] %vm2057, %v1321
  %2325 = vst.msk [vmem:[%s1 + $0x858] sm:$0xff] %vm2057, %v1324
  %2326 = vst.msk [vmem:[%s1 + $0x860] sm:$0xff] %vm2057, %v1327
  %2327 = vst.msk [vmem:[%s1 + $0x868] sm:$0xff] %vm2057, %v1330
  %2328 = vst.msk [vmem:[%s1 + $0x870] sm:$0xff] %vm2057, %v1333
  %2329 = vst.msk [vmem:[%s1 + $0x878] sm:$0xff] %vm2057, %v1336
  %2330 = vst.msk [vmem:[%s1 + $0x880] sm:$0xff] %vm2057, %v1339
  %2331 = vst.msk [vmem:[%s1 + $0x888] sm:$0xff] %vm2057, %v1342
  %2332 = vst.msk [vmem:[%s1 + $0x890] sm:$0xff] %vm2057, %v1345
  %2333 = vst.msk [vmem:[%s1 + $0x898] sm:$0xff] %vm2057, %v1348
  %2334 = vst.msk [vmem:[%s1 + $0x8a0] sm:$0xff] %vm2057, %v1351
  %2335 = vst.msk [vmem:[%s1 + $0x8a8] sm:$0xff] %vm2057, %v1354
  %2336 = vst.msk [vmem:[%s1 + $0x8b0] sm:$0xff] %vm2057, %v1357
  %2337 = vst.msk [vmem:[%s1 + $0x8b8] sm:$0xff] %vm2057, %v1360
  %2338 = vst.msk [vmem:[%s1 + $0x8c0] sm:$0xff] %vm2057, %v1363
  %2339 = vst.msk [vmem:[%s1 + $0x8c8] sm:$0xff] %vm2057, %v1366
  %2340 = vst.msk [vmem:[%s1 + $0x8d0] sm:$0xff] %vm2057, %v1369
  %2341 = vst.msk [vmem:[%s1 + $0x8d8] sm:$0xff] %vm2057, %v1372
  %2342 = vst.msk [vmem:[%s1 + $0x8e0] sm:$0xff] %vm2057, %v1375
  %2343 = vst.msk [vmem:[%s1 + $0x8e8] sm:$0xff] %vm2057, %v1378
  %2344 = vst.msk [vmem:[%s1 + $0x8f0] sm:$0xff] %vm2057, %v1381
  %2345 = vst.msk [vmem:[%s1 + $0x8f8] sm:$0xff] %vm2057, %v1384
  %2346 = vst.msk [vmem:[%s1 + $0x900] sm:$0xff] %vm2057, %v1387
  %2347 = vst.msk [vmem:[%s1 + $0x908] sm:$0xff] %vm2057, %v1390
  %2348 = vst.msk [vmem:[%s1 + $0x910] sm:$0xff] %vm2057, %v1393
  %2349 = vst.msk [vmem:[%s1 + $0x918] sm:$0xff] %vm2057, %v1396
  %2350 = vst.msk [vmem:[%s1 + $0x920] sm:$0xff] %vm2057, %v1399
  %2351 = vst.msk [vmem:[%s1 + $0x928] sm:$0xff] %vm2057, %v1402
  %2352 = vst.msk [vmem:[%s1 + $0x930] sm:$0xff] %vm2057, %v1405
  %2353 = vst.msk [vmem:[%s1 + $0x938] sm:$0xff] %vm2057, %v1408
  %2354 = vst.msk [vmem:[%s1 + $0x940] sm:$0xff] %vm2057, %v1411
  %2355 = vst.msk [vmem:[%s1 + $0x948] sm:$0xff] %vm2057, %v1414
  %2356 = vst.msk [vmem:[%s1 + $0x950] sm:$0xff] %vm2057, %v1417
  %2357 = vst.msk [vmem:[%s1 + $0x958] sm:$0xff] %vm2057, %v1420
  %2358 = vst.msk [vmem:[%s1 + $0x960] sm:$0xff] %vm2057, %v1423
  %2359 = vst.msk [vmem:[%s1 + $0x968] sm:$0xff] %vm2057, %v1426
  %2360 = vst.msk [vmem:[%s1 + $0x970] sm:$0xff] %vm2057, %v1429
  %2361 = vst.msk [vmem:[%s1 + $0x978] sm:$0xff] %vm2057, %v1432
  %2362 = vst.msk [vmem:[%s1 + $0x980] sm:$0xff] %vm2057, %v1435
  %2363 = vst.msk [vmem:[%s1 + $0x988] sm:$0xff] %vm2057, %v1438
  %2364 = vst.msk [vmem:[%s1 + $0x990] sm:$0xff] %vm2057, %v1441
  %2365 = vst.msk [vmem:[%s1 + $0x998] sm:$0xff] %vm2057, %v1444
  %2366 = vst.msk [vmem:[%s1 + $0x9a0] sm:$0xff] %vm2057, %v1447
  %2367 = vst.msk [vmem:[%s1 + $0x9a8] sm:$0xff] %vm2057, %v1450
  %2368 = vst.msk [vmem:[%s1 + $0x9b0] sm:$0xff] %vm2057, %v1453
  %2369 = vst.msk [vmem:[%s1 + $0x9b8] sm:$0xff] %vm2057, %v1456
  %2370 = vst.msk [vmem:[%s1 + $0x9c0] sm:$0xff] %vm2057, %v1459
  %2371 = vst.msk [vmem:[%s1 + $0x9c8] sm:$0xff] %vm2057, %v1462
  %2372 = vst.msk [vmem:[%s1 + $0x9d0] sm:$0xff] %vm2057, %v1465
  %2373 = vst.msk [vmem:[%s1 + $0x9d8] sm:$0xff] %vm2057, %v1468
  %2374 = vst.msk [vmem:[%s1 + $0x9e0] sm:$0xff] %vm2057, %v1471
  %2375 = vst.msk [vmem:[%s1 + $0x9e8] sm:$0xff] %vm2057, %v1474
  %2376 = vst.msk [vmem:[%s1 + $0x9f0] sm:$0xff] %vm2057, %v1477
  %2377 = vst.msk [vmem:[%s1 + $0x9f8] sm:$0xff] %vm2057, %v1480
  %2378 = vst.msk [vmem:[%s1 + $0xa00] sm:$0xff] %vm2057, %v1483
  %2379 = vst.msk [vmem:[%s1 + $0xa08] sm:$0xff] %vm2057, %v1486
  %2380 = vst.msk [vmem:[%s1 + $0xa10] sm:$0xff] %vm2057, %v1489
  %2381 = vst.msk [vmem:[%s1 + $0xa18] sm:$0xff] %vm2057, %v1492
  %2382 = vst.msk [vmem:[%s1 + $0xa20] sm:$0xff] %vm2057, %v1495
  %2383 = vst.msk [vmem:[%s1 + $0xa28] sm:$0xff] %vm2057, %v1498
  %2384 = vst.msk [vmem:[%s1 + $0xa30] sm:$0xff] %vm2057, %v1501
  %2385 = vst.msk [vmem:[%s1 + $0xa38] sm:$0xff] %vm2057, %v1504
  %2386 = vst.msk [vmem:[%s1 + $0xa40] sm:$0xff] %vm2057, %v1507
  %2387 = vst.msk [vmem:[%s1 + $0xa48] sm:$0xff] %vm2057, %v1510
  %2388 = vst.msk [vmem:[%s1 + $0xa50] sm:$0xff] %vm2057, %v1513
  %2389 = vst.msk [vmem:[%s1 + $0xa58] sm:$0xff] %vm2057, %v1516
  %2390 = vst.msk [vmem:[%s1 + $0xa60] sm:$0xff] %vm2057, %v1519
  %2391 = vst.msk [vmem:[%s1 + $0xa68] sm:$0xff] %vm2057, %v1522
  %2392 = vst.msk [vmem:[%s1 + $0xa70] sm:$0xff] %vm2057, %v1525
  %2393 = vst.msk [vmem:[%s1 + $0xa78] sm:$0xff] %vm2057, %v1528
  %2394 = vst.msk [vmem:[%s1 + $0xa80] sm:$0xff] %vm2057, %v1531
  %2395 = vst.msk [vmem:[%s1 + $0xa88] sm:$0xff] %vm2057, %v1534
  %2396 = vst.msk [vmem:[%s1 + $0xa90] sm:$0xff] %vm2057, %v1537
  %2397 = vst.msk [vmem:[%s1 + $0xa98] sm:$0xff] %vm2057, %v1540
  %2398 = vst.msk [vmem:[%s1 + $0xaa0] sm:$0xff] %vm2057, %v1543
  %2399 = vst.msk [vmem:[%s1 + $0xaa8] sm:$0xff] %vm2057, %v1546
  %2400 = vst.msk [vmem:[%s1 + $0xab0] sm:$0xff] %vm2057, %v1549
  %2401 = vst.msk [vmem:[%s1 + $0xab8] sm:$0xff] %vm2057, %v1552
  %2402 = vst.msk [vmem:[%s1 + $0xac0] sm:$0xff] %vm2057, %v1555
  %2403 = vst.msk [vmem:[%s1 + $0xac8] sm:$0xff] %vm2057, %v1558
  %2404 = vst.msk [vmem:[%s1 + $0xad0] sm:$0xff] %vm2057, %v1561
  %2405 = vst.msk [vmem:[%s1 + $0xad8] sm:$0xff] %vm2057, %v1564
  %2406 = vst.msk [vmem:[%s1 + $0xae0] sm:$0xff] %vm2057, %v1567
  %2407 = vst.msk [vmem:[%s1 + $0xae8] sm:$0xff] %vm2057, %v1570
  %2408 = vst.msk [vmem:[%s1 + $0xaf0] sm:$0xff] %vm2057, %v1573
  %2409 = vst.msk [vmem:[%s1 + $0xaf8] sm:$0xff] %vm2057, %v1576
  %2410 = vst.msk [vmem:[%s1 + $0xb00] sm:$0xff] %vm2057, %v1579
  %2411 = vst.msk [vmem:[%s1 + $0xb08] sm:$0xff] %vm2057, %v1582
  %2412 = vst.msk [vmem:[%s1 + $0xb10] sm:$0xff] %vm2057, %v1585
  %2413 = vst.msk [vmem:[%s1 + $0xb18] sm:$0xff] %vm2057, %v1588
  %2414 = vst.msk [vmem:[%s1 + $0xb20] sm:$0xff] %vm2057, %v1591
  %2415 = vst.msk [vmem:[%s1 + $0xb28] sm:$0xff] %vm2057, %v1594
  %2416 = vst.msk [vmem:[%s1 + $0xb30] sm:$0xff] %vm2057, %v1597
  %2417 = vst.msk [vmem:[%s1 + $0xb38] sm:$0xff] %vm2057, %v1600
  %2418 = vst.msk [vmem:[%s1 + $0xb40] sm:$0xff] %vm2057, %v1603
  %2419 = vst.msk [vmem:[%s1 + $0xb48] sm:$0xff] %vm2057, %v1606
  %2420 = vst.msk [vmem:[%s1 + $0xb50] sm:$0xff] %vm2057, %v1609
  %2421 = vst.msk [vmem:[%s1 + $0xb58] sm:$0xff] %vm2057, %v1612
  %2422 = vst.msk [vmem:[%s1 + $0xb60] sm:$0xff] %vm2057, %v1615
  %2423 = vst.msk [vmem:[%s1 + $0xb68] sm:$0xff] %vm2057, %v1618
  %2424 = vst.msk [vmem:[%s1 + $0xb70] sm:$0xff] %vm2057, %v1621
  %2425 = vst.msk [vmem:[%s1 + $0xb78] sm:$0xff] %vm2057, %v1624
  %2426 = vst.msk [vmem:[%s1 + $0xb80] sm:$0xff] %vm2057, %v1627
  %2427 = vst.msk [vmem:[%s1 + $0xb88] sm:$0xff] %vm2057, %v1630
  %2428 = vst.msk [vmem:[%s1 + $0xb90] sm:$0xff] %vm2057, %v1633
  %2429 = vst.msk [vmem:[%s1 + $0xb98] sm:$0xff] %vm2057, %v1636
  %2430 = vst.msk [vmem:[%s1 + $0xba0] sm:$0xff] %vm2057, %v1639
  %2431 = vst.msk [vmem:[%s1 + $0xba8] sm:$0xff] %vm2057, %v1642
  %2432 = vst.msk [vmem:[%s1 + $0xbb0] sm:$0xff] %vm2057, %v1645
  %2433 = vst.msk [vmem:[%s1 + $0xbb8] sm:$0xff] %vm2057, %v1648
  %2434 = vst.msk [vmem:[%s1 + $0xbc0] sm:$0xff] %vm2057, %v1651
  %2435 = vst.msk [vmem:[%s1 + $0xbc8] sm:$0xff] %vm2057, %v1654
  %2436 = vst.msk [vmem:[%s1 + $0xbd0] sm:$0xff] %vm2057, %v1657
  %2437 = vst.msk [vmem:[%s1 + $0xbd8] sm:$0xff] %vm2057, %v1660
  %2438 = vst.msk [vmem:[%s1 + $0xbe0] sm:$0xff] %vm2057, %v1663
  %2439 = vst.msk [vmem:[%s1 + $0xbe8] sm:$0xff] %vm2057, %v1666
  %2440 = vst.msk [vmem:[%s1 + $0xbf0] sm:$0xff] %vm2057, %v1669
  %2441 = vst.msk [vmem:[%s1 + $0xbf8] sm:$0xff] %vm2057, %v1672
  %2442 = vst.msk [vmem:[%s1 + $0xc00] sm:$0xff] %vm2057, %v1675
  %2443 = vst.msk [vmem:[%s1 + $0xc08] sm:$0xff] %vm2057, %v1678
  %2444 = vst.msk [vmem:[%s1 + $0xc10] sm:$0xff] %vm2057, %v1681
  %2445 = vst.msk [vmem:[%s1 + $0xc18] sm:$0xff] %vm2057, %v1684
  %2446 = vst.msk [vmem:[%s1 + $0xc20] sm:$0xff] %vm2057, %v1687
  %2447 = vst.msk [vmem:[%s1 + $0xc28] sm:$0xff] %vm2057, %v1690
  %2448 = vst.msk [vmem:[%s1 + $0xc30] sm:$0xff] %vm2057, %v1693
  %2449 = vst.msk [vmem:[%s1 + $0xc38] sm:$0xff] %vm2057, %v1696
  %2450 = vst.msk [vmem:[%s1 + $0xc40] sm:$0xff] %vm2057, %v1699
  %2451 = vst.msk [vmem:[%s1 + $0xc48] sm:$0xff] %vm2057, %v1702
  %2452 = vst.msk [vmem:[%s1 + $0xc50] sm:$0xff] %vm2057, %v1705
  %2453 = vst.msk [vmem:[%s1 + $0xc58] sm:$0xff] %vm2057, %v1708
  %2454 = vst.msk [vmem:[%s1 + $0xc60] sm:$0xff] %vm2057, %v1711
  %2455 = vst.msk [vmem:[%s1 + $0xc68] sm:$0xff] %vm2057, %v1714
  %2456 = vst.msk [vmem:[%s1 + $0xc70] sm:$0xff] %vm2057, %v1717
  %2457 = vst.msk [vmem:[%s1 + $0xc78] sm:$0xff] %vm2057, %v1720
  %2458 = vst.msk [vmem:[%s1 + $0xc80] sm:$0xff] %vm2057, %v1723
  %2459 = vst.msk [vmem:[%s1 + $0xc88] sm:$0xff] %vm2057, %v1726
  %2460 = vst.msk [vmem:[%s1 + $0xc90] sm:$0xff] %vm2057, %v1729
  %2461 = vst.msk [vmem:[%s1 + $0xc98] sm:$0xff] %vm2057, %v1732
  %2462 = vst.msk [vmem:[%s1 + $0xca0] sm:$0xff] %vm2057, %v1735
  %2463 = vst.msk [vmem:[%s1 + $0xca8] sm:$0xff] %vm2057, %v1738
  %2464 = vst.msk [vmem:[%s1 + $0xcb0] sm:$0xff] %vm2057, %v1741
  %2465 = vst.msk [vmem:[%s1 + $0xcb8] sm:$0xff] %vm2057, %v1744
  %2466 = vst.msk [vmem:[%s1 + $0xcc0] sm:$0xff] %vm2057, %v1747
  %2467 = vst.msk [vmem:[%s1 + $0xcc8] sm:$0xff] %vm2057, %v1750
  %2468 = vst.msk [vmem:[%s1 + $0xcd0] sm:$0xff] %vm2057, %v1753
  %2469 = vst.msk [vmem:[%s1 + $0xcd8] sm:$0xff] %vm2057, %v1756
  %2470 = vst.msk [vmem:[%s1 + $0xce0] sm:$0xff] %vm2057, %v1759
  %2471 = vst.msk [vmem:[%s1 + $0xce8] sm:$0xff] %vm2057, %v1762
  %2472 = vst.msk [vmem:[%s1 + $0xcf0] sm:$0xff] %vm2057, %v1765
  %2473 = vst.msk [vmem:[%s1 + $0xcf8] sm:$0xff] %vm2057, %v1768
  %2474 = vst.msk [vmem:[%s1 + $0xd00] sm:$0xff] %vm2057, %v1771
  %2475 = vst.msk [vmem:[%s1 + $0xd08] sm:$0xff] %vm2057, %v1774
  %2476 = vst.msk [vmem:[%s1 + $0xd10] sm:$0xff] %vm2057, %v1777
  %2477 = vst.msk [vmem:[%s1 + $0xd18] sm:$0xff] %vm2057, %v1780
  %2478 = vst.msk [vmem:[%s1 + $0xd20] sm:$0xff] %vm2057, %v1783
  %2479 = vst.msk [vmem:[%s1 + $0xd28] sm:$0xff] %vm2057, %v1786
  %2480 = vst.msk [vmem:[%s1 + $0xd30] sm:$0xff] %vm2057, %v1789
  %2481 = vst.msk [vmem:[%s1 + $0xd38] sm:$0xff] %vm2057, %v1792
  %2482 = vst.msk [vmem:[%s1 + $0xd40] sm:$0xff] %vm2057, %v1795
  %2483 = vst.msk [vmem:[%s1 + $0xd48] sm:$0xff] %vm2057, %v1798
  %2484 = vst.msk [vmem:[%s1 + $0xd50] sm:$0xff] %vm2057, %v1801
  %2485 = vst.msk [vmem:[%s1 + $0xd58] sm:$0xff] %vm2057, %v1804
  %2486 = vst.msk [vmem:[%s1 + $0xd60] sm:$0xff] %vm2057, %v1807
  %2487 = vst.msk [vmem:[%s1 + $0xd68] sm:$0xff] %vm2057, %v1810
  %2488 = vst.msk [vmem:[%s1 + $0xd70] sm:$0xff] %vm2057, %v1813
  %2489 = vst.msk [vmem:[%s1 + $0xd78] sm:$0xff] %vm2057, %v1816
  %2490 = vst.msk [vmem:[%s1 + $0xd80] sm:$0xff] %vm2057, %v1819
  %2491 = vst.msk [vmem:[%s1 + $0xd88] sm:$0xff] %vm2057, %v1822
  %2492 = vst.msk [vmem:[%s1 + $0xd90] sm:$0xff] %vm2057, %v1825
  %2493 = vst.msk [vmem:[%s1 + $0xd98] sm:$0xff] %vm2057, %v1828
  %2494 = vst.msk [vmem:[%s1 + $0xda0] sm:$0xff] %vm2057, %v1831
  %2495 = vst.msk [vmem:[%s1 + $0xda8] sm:$0xff] %vm2057, %v1834
  %2496 = vst.msk [vmem:[%s1 + $0xdb0] sm:$0xff] %vm2057, %v1837
  %2497 = vst.msk [vmem:[%s1 + $0xdb8] sm:$0xff] %vm2057, %v1840
  %2498 = vst.msk [vmem:[%s1 + $0xdc0] sm:$0xff] %vm2057, %v1843
  %2499 = vst.msk [vmem:[%s1 + $0xdc8] sm:$0xff] %vm2057, %v1846
  %2500 = vst.msk [vmem:[%s1 + $0xdd0] sm:$0xff] %vm2057, %v1849
  %2501 = vst.msk [vmem:[%s1 + $0xdd8] sm:$0xff] %vm2057, %v1852
  %2502 = vst.msk [vmem:[%s1 + $0xde0] sm:$0xff] %vm2057, %v1855
  %2503 = vst.msk [vmem:[%s1 + $0xde8] sm:$0xff] %vm2057, %v1858
  %2504 = vst.msk [vmem:[%s1 + $0xdf0] sm:$0xff] %vm2057, %v1861
  %2505 = vst.msk [vmem:[%s1 + $0xdf8] sm:$0xff] %vm2057, %v1864
  %2506 = vst.msk [vmem:[%s1 + $0xe00] sm:$0xff] %vm2057, %v1867
  %2507 = vst.msk [vmem:[%s1 + $0xe08] sm:$0xff] %vm2057, %v1870
  %2508 = vst.msk [vmem:[%s1 + $0xe10] sm:$0xff] %vm2057, %v1873
  %2509 = vst.msk [vmem:[%s1 + $0xe18] sm:$0xff] %vm2057, %v1876
  %2510 = vst.msk [vmem:[%s1 + $0xe20] sm:$0xff] %vm2057, %v1879
  %2511 = vst.msk [vmem:[%s1 + $0xe28] sm:$0xff] %vm2057, %v1882
  %2512 = vst.msk [vmem:[%s1 + $0xe30] sm:$0xff] %vm2057, %v1885
  %2513 = vst.msk [vmem:[%s1 + $0xe38] sm:$0xff] %vm2057, %v1888
  %2514 = vst.msk [vmem:[%s1 + $0xe40] sm:$0xff] %vm2057, %v1891
  %2515 = vst.msk [vmem:[%s1 + $0xe48] sm:$0xff] %vm2057, %v1894
  %2516 = vst.msk [vmem:[%s1 + $0xe50] sm:$0xff] %vm2057, %v1897
  %2517 = vst.msk [vmem:[%s1 + $0xe58] sm:$0xff] %vm2057, %v1900
  %2518 = vst.msk [vmem:[%s1 + $0xe60] sm:$0xff] %vm2057, %v1903
  %2519 = vst.msk [vmem:[%s1 + $0xe68] sm:$0xff] %vm2057, %v1906
  %2520 = vst.msk [vmem:[%s1 + $0xe70] sm:$0xff] %vm2057, %v1909
  %2521 = vst.msk [vmem:[%s1 + $0xe78] sm:$0xff] %vm2057, %v1912
  %2522 = vst.msk [vmem:[%s1 + $0xe80] sm:$0xff] %vm2057, %v1915
  %2523 = vst.msk [vmem:[%s1 + $0xe88] sm:$0xff] %vm2057, %v1918
  %2524 = vst.msk [vmem:[%s1 + $0xe90] sm:$0xff] %vm2057, %v1921
  %2525 = vst.msk [vmem:[%s1 + $0xe98] sm:$0xff] %vm2057, %v1924
  %2526 = vst.msk [vmem:[%s1 + $0xea0] sm:$0xff] %vm2057, %v1927
  %2527 = vst.msk [vmem:[%s1 + $0xea8] sm:$0xff] %vm2057, %v1930
  %2528 = vst.msk [vmem:[%s1 + $0xeb0] sm:$0xff] %vm2057, %v1933
  %2529 = vst.msk [vmem:[%s1 + $0xeb8] sm:$0xff] %vm2057, %v1936
  %2530 = vst.msk [vmem:[%s1 + $0xec0] sm:$0xff] %vm2057, %v1939
  %2531 = vst.msk [vmem:[%s1 + $0xec8] sm:$0xff] %vm2057, %v1942
  %2532 = vst.msk [vmem:[%s1 + $0xed0] sm:$0xff] %vm2057, %v1945
  %2533 = vst.msk [vmem:[%s1 + $0xed8] sm:$0xff] %vm2057, %v1948
  %2534 = vst.msk [vmem:[%s1 + $0xee0] sm:$0xff] %vm2057, %v1951
  %2535 = vst.msk [vmem:[%s1 + $0xee8] sm:$0xff] %vm2057, %v1954
  %2536 = vst.msk [vmem:[%s1 + $0xef0] sm:$0xff] %vm2057, %v1957
  %2537 = vst.msk [vmem:[%s1 + $0xef8] sm:$0xff] %vm2057, %v1960
  %2538 = vst.msk [vmem:[%s1 + $0xf00] sm:$0xff] %vm2057, %v1963
  %2539 = vst.msk [vmem:[%s1 + $0xf08] sm:$0xff] %vm2057, %v1966
  %2540 = vst.msk [vmem:[%s1 + $0xf10] sm:$0xff] %vm2057, %v1969
  %2541 = vst.msk [vmem:[%s1 + $0xf18] sm:$0xff] %vm2057, %v1972
  %2542 = vst.msk [vmem:[%s1 + $0xf20] sm:$0xff] %vm2057, %v1975
  %2543 = vst.msk [vmem:[%s1 + $0xf28] sm:$0xff] %vm2057, %v1978
  %2544 = vst.msk [vmem:[%s1 + $0xf30] sm:$0xff] %vm2057, %v1981
  %2545 = vst.msk [vmem:[%s1 + $0xf38] sm:$0xff] %vm2057, %v1984
  %2546 = vst.msk [vmem:[%s1 + $0xf40] sm:$0xff] %vm2057, %v1987
  %2547 = vst.msk [vmem:[%s1 + $0xf48] sm:$0xff] %vm2057, %v1990
  %2548 = vst.msk [vmem:[%s1 + $0xf50] sm:$0xff] %vm2057, %v1993
  %2549 = vst.msk [vmem:[%s1 + $0xf58] sm:$0xff] %vm2057, %v1996
  %2550 = vst.msk [vmem:[%s1 + $0xf60] sm:$0xff] %vm2057, %v1999
  %2551 = vst.msk [vmem:[%s1 + $0xf68] sm:$0xff] %vm2057, %v2002
  %2552 = vst.msk [vmem:[%s1 + $0xf70] sm:$0xff] %vm2057, %v2005
  %2553 = vst.msk [vmem:[%s1 + $0xf78] sm:$0xff] %vm2057, %v2008
  %2554 = vst.msk [vmem:[%s1 + $0xf80] sm:$0xff] %vm2057, %v2011
  %2555 = vst.msk [vmem:[%s1 + $0xf88] sm:$0xff] %vm2057, %v2014
  %2556 = vst.msk [vmem:[%s1 + $0xf90] sm:$0xff] %vm2057, %v2017
  %2557 = vst.msk [vmem:[%s1 + $0xf98] sm:$0xff] %vm2057, %v2020
  %2558 = vst.msk [vmem:[%s1 + $0xfa0] sm:$0xff] %vm2057, %v2023
  %2559 = vst.msk [vmem:[%s1 + $0xfa8] sm:$0xff] %vm2057, %v2026
  %2560 = vst.msk [vmem:[%s1 + $0xfb0] sm:$0xff] %vm2057, %v2029
  %2561 = vst.msk [vmem:[%s1 + $0xfb8] sm:$0xff] %vm2057, %v2032
  %2562 = vst.msk [vmem:[%s1 + $0xfc0] sm:$0xff] %vm2057, %v2035
  %2563 = vst.msk [vmem:[%s1 + $0xfc8] sm:$0xff] %vm2057, %v2038
  %2564 = vst.msk [vmem:[%s1 + $0xfd0] sm:$0xff] %vm2057, %v2041
  %2565 = vst.msk [vmem:[%s1 + $0xfd8] sm:$0xff] %vm2057, %v2044
  %2566 = vst.msk [vmem:[%s1 + $0xfe0] sm:$0xff] %vm2057, %v2047
  %2567 = vst.msk [vmem:[%s1 + $0xfe8] sm:$0xff] %vm2057, %v2050
  %2568 = vst.msk [vmem:[%s1 + $0xff0] sm:$0xff] %vm2057, %v2053
  %2569 = vst.msk [vmem:[%s1 + $0xff8] sm:$0xff] %vm2057, %v2056
  // Predicated region
  $region6: #{tpu_custom_call.1} parent=0 // pred_check
    _
  $region7: #{tpu_custom_call.1} parent=0 // pred_check_branch
    %2571 = sbr.rel (0) target = $region9
  $region8: #{tpu_custom_call.1} parent=0 // pred_region
    _
  $region9: #{tpu_custom_call.1} parent=0 // pred_fallthru
    _
  // Predicated region
  $region10: #{tpu_custom_call.1} parent=0 // pred_check
    _
  $region11: #{tpu_custom_call.1} parent=0 // pred_check_branch
    %2573 = sbr.rel (0) target = $region13
  $region12: #{tpu_custom_call.1} parent=0 // pred_region
    _
  $region13: #{tpu_custom_call.1} parent=0 // pred_fallthru
    _

</llo_original>
